<compile_context>
chip_gen: v6e
topology: v6e:2x2x1
jax: 0.10.0
libtpu: 0.0.40
codegen_flags: <defaults>
</compile_context>

<pallas_src>
import functools

import jax
import jax.numpy as jnp
from jax import lax
from jax.experimental import pallas as pl
from jax.experimental.pallas import tpu as pltpu


# ---------------------------------------------------------------------------
# In-kernel helpers (operate on (C, H*W) f32 tiles, channels on sublanes).
# ---------------------------------------------------------------------------
def _gn_relu(x, gamma, beta, gmat, num_groups, eps):
    """GroupNorm (affine, biased var) + ReLU on a (C, HW) tile.

    gmat is the (C, C) block-diagonal 0/1 matrix with 1 where two channels
    belong to the same group (identity when group size == 1).
    """
    C, HW = x.shape
    cpg = C // num_groups
    inv_n = 1.0 / float(cpg * HW)
    s1 = jnp.sum(x, axis=-1, keepdims=True)           # (C, 1)
    s2 = jnp.sum(x * x, axis=-1, keepdims=True)       # (C, 1)
    ss = jnp.concatenate([s1, s2], axis=1)            # (C, 2)
    gss = jnp.dot(gmat, ss, preferred_element_type=jnp.float32)   # group sums
    mean = gss[:, 0:1] * inv_n                         # per-channel group mean
    ex2 = gss[:, 1:2] * inv_n
    var = ex2 - mean * mean                            # biased variance
    scale = gamma * lax.rsqrt(var + eps)               # fold affine into scale
    shift = beta - mean * scale
    return jnp.maximum(x * scale + shift, 0.0)


def _conv_same(y, w_flat, widx, W, K):
    """'Same' KxK conv (stride 1, pad (K-1)//2) as one im2col matmul.

    y:      (Cin, H*W)       activation, channels on sublanes
    w_flat: (Cout, K*K*Cin)  weights flattened as [kh, kw, ci]
    widx:   (1, H*W) int32   column index (w coordinate) of each lane
    """
    Cin, HW = y.shape
    r = (K - 1) // 2
    pad = r * W + r                                     # max |flat shift|
    zeros = jnp.zeros((Cin, pad), y.dtype)
    ypad = jnp.concatenate([zeros, y, zeros], axis=1)   # (Cin, HW + 2*pad)

    taps = []
    for dh in range(-r, r + 1):
        for dw in range(-r, r + 1):
            d = dh * W + dw
            tap = ypad[:, pad + d: pad + d + HW]        # static lane slice
            # Row (dh) overreach always lands in the zero extension; only the
            # column (dw) wrap-around needs an explicit mask.
            if dw > 0:
                tap = jnp.where(widx < (W - dw), tap, 0.0)
            elif dw < 0:
                tap = jnp.where(widx >= (-dw), tap, 0.0)
            taps.append(tap)
    im2col = jnp.concatenate(taps, axis=0)              # (K*K*Cin, HW)
    return jnp.dot(w_flat, im2col, preferred_element_type=jnp.float32)


def _cascade(out, x):
    """cascade(out, x): add x into the leading min(Cout, Cin) channels."""
    Cout, Cin = out.shape[0], x.shape[0]
    m = min(Cout, Cin)
    if Cout <= Cin:
        return out + x[:m]
    return jnp.concatenate([out[:m] + x[:m], out[m:]], axis=0)


# ---------------------------------------------------------------------------
# Fused kernel: whole InvertedCascadeLayer for one batch element.
# ---------------------------------------------------------------------------
def _inverted_cascade_kernel(x_ref, x2_ref, colid_ref,
                             m1_ref, g1_ref, b1_ref, w1_ref,
                             m2_ref, g2_ref, b2_ref, w2_ref,
                             o_ref, *, num_groups, eps, W, K):
    x = x_ref[0]                                        # (Cx,  HW)
    x2 = x2_ref[0]                                      # (Cx2, HW)
    widx = colid_ref[...]                               # (1,   HW)

    # ConvBlock1: conv(relu(gn(x))), then cascade with x.
    y1 = _gn_relu(x, g1_ref[...], b1_ref[...], m1_ref[...], num_groups, eps)
    o1 = _conv_same(y1, w1_ref[...], widx, W, K)        # (Cout, HW)
    o1 = _cascade(o1, x)

    # ConvBlock2 on channel-concat [o1, x2], then cascade with x.
    z = jnp.concatenate([o1, x2], axis=0)               # (Cout + Cx2, HW)
    y2 = _gn_relu(z, g2_ref[...], b2_ref[...], m2_ref[...], num_groups, eps)
    o2 = _conv_same(y2, w2_ref[...], widx, W, K)        # (Cout, HW)
    o_ref[0] = _cascade(o2, x).astype(o_ref.dtype)


# ---------------------------------------------------------------------------
# Plain-JAX glue: `scaling` (resize x to x2's spatial size).
# ---------------------------------------------------------------------------
def _scaling(maps, output_size):
    N, C, H, W = maps.shape
    H_t, W_t = output_size[2], output_size[3]
    if (H, W) == (H_t, W_t):
        return maps
    if H % H_t == 0 and W % W_t == 0:                   # exact avg-pool downscale
        ph, pw = H // H_t, W // W_t
        return maps.reshape(N, C, H_t, ph, W_t, pw).mean(axis=(3, 5))
    # TODO(synk): general ceil_mode avg_pool2d + adaptive_avg_pool2d resize path.
    raise NotImplementedError("scaling(): non-integer resize not implemented")


def _group_matrix(C, num_groups, dtype):
    cpg = C // num_groups
    gid = jnp.arange(C, dtype=jnp.int32) // cpg
    return (gid[:, None] == gid[None, :]).astype(dtype)  # (C, C) block-diagonal


# ---------------------------------------------------------------------------
# Public wrapper: InvertedCascadeLayer forward (NCHW in / NCHW out).
# ---------------------------------------------------------------------------
def inverted_cascade_layer(x, x2, params, *, num_groups=16, padding=1, eps=1e-5):
    x = _scaling(x, x2.shape)
    N, Cx, H, W = x.shape
    N2, Cx2, H2, W2 = x2.shape
    assert (N, H, W) == (N2, H2, W2)

    conv1_w = params["conv1_w"]                          # (Cout, Cx,       K, K)
    conv2_w = params["conv2_w"]                          # (Cout, Cout+Cx2, K, K)
    Cout, Cin1, K, _ = conv1_w.shape
    Cz = Cout + Cx2
    assert Cin1 == Cx and conv2_w.shape == (Cout, Cz, K, K)
    assert K % 2 == 1 and padding == (K - 1) // 2, "kernel implements 'same' conv"
    assert Cx % num_groups == 0 and Cz % num_groups == 0
    HW = H * W

    # Weights: OIHW -> (Cout, K*K*Cin) flattened [kh, kw, ci] (matches im2col rows).
    w1 = jnp.transpose(conv1_w, (0, 2, 3, 1)).reshape(Cout, K * K * Cx)
    w2 = jnp.transpose(conv2_w, (0, 2, 3, 1)).reshape(Cout, K * K * Cz)
    g1 = params["gn1_gamma"].reshape(Cx, 1)
    b1 = params["gn1_beta"].reshape(Cx, 1)
    g2 = params["gn2_gamma"].reshape(Cz, 1)
    b2 = params["gn2_beta"].reshape(Cz, 1)
    m1 = _group_matrix(Cx, num_groups, x.dtype)
    m2 = _group_matrix(Cz, num_groups, x.dtype)
    col_ids = jnp.tile(jnp.arange(W, dtype=jnp.int32), H)[None, :]   # (1, HW)

    kernel = functools.partial(_inverted_cascade_kernel,
                               num_groups=num_groups, eps=eps, W=W, K=K)
    out = pl.pallas_call(
        kernel,
        out_shape=jax.ShapeDtypeStruct((N, Cout, HW), x.dtype),
        grid=(N,),
        in_specs=[
            pl.BlockSpec((1, Cx, HW), lambda n: (n, 0, 0)),
            pl.BlockSpec((1, Cx2, HW), lambda n: (n, 0, 0)),
            pl.BlockSpec((1, HW), lambda n: (0, 0)),
            pl.BlockSpec((Cx, Cx), lambda n: (0, 0)),
            pl.BlockSpec((Cx, 1), lambda n: (0, 0)),
            pl.BlockSpec((Cx, 1), lambda n: (0, 0)),
            pl.BlockSpec((Cout, K * K * Cx), lambda n: (0, 0)),
            pl.BlockSpec((Cz, Cz), lambda n: (0, 0)),
            pl.BlockSpec((Cz, 1), lambda n: (0, 0)),
            pl.BlockSpec((Cz, 1), lambda n: (0, 0)),
            pl.BlockSpec((Cout, K * K * Cz), lambda n: (0, 0)),
        ],
        out_specs=pl.BlockSpec((1, Cout, HW), lambda n: (n, 0, 0)),
        compiler_params=pltpu.CompilerParams(dimension_semantics=("parallel",)),
    )(x.reshape(N, Cx, HW), x2.reshape(N, Cx2, HW), col_ids,
      m1, g1, b1, w1, m2, g2, b2, w2)
    return out.reshape(N, Cout, H, W)


# ---------------------------------------------------------------------------
# Pure-JAX reference (mirrors the PyTorch module) for verification.
# ---------------------------------------------------------------------------
def _gn_ref(x, gamma, beta, groups, eps=1e-5):
    N, C, H, W = x.shape
    xg = x.reshape(N, groups, -1)
    mean = xg.mean(-1, keepdims=True)
    var = xg.var(-1, keepdims=True)
    xn = ((xg - mean) * lax.rsqrt(var + eps)).reshape(N, C, H, W)
    return xn * gamma[None, :, None, None] + beta[None, :, None, None]


def _conv_ref(x, w, padding):
    return lax.conv_general_dilated(
        x, w, window_strides=(1, 1),
        padding=((padding, padding), (padding, padding)),
        dimension_numbers=("NCHW", "OIHW", "NCHW"))


def _cascade_ref(out, x):
    if out.shape[1] > x.shape[1]:
        ci = x.shape[1]
        return jnp.concatenate([out[:, :ci] + x, out[:, ci:]], axis=1)
    if out.shape[1] == x.shape[1]:
        return out + x
    co = out.shape[1]
    return x[:, :co] + out


def reference(x, x2, params, *, num_groups, padding, eps=1e-5):
    x = _scaling(x, x2.shape)
    y = _conv_ref(jnp.maximum(_gn_ref(x, params["gn1_gamma"], params["gn1_beta"],
                                      num_groups, eps), 0.0),
                  params["conv1_w"], padding)
    y = _cascade_ref(y, x)
    z = jnp.concatenate([y, x2], axis=1)
    y2 = _conv_ref(jnp.maximum(_gn_ref(z, params["gn2_gamma"], params["gn2_beta"],
                                       num_groups, eps), 0.0),
                   params["conv2_w"], padding)
    return _cascade_ref(y2, x)


if __name__ == "__main__":
    # InvertedCascadeLayer(in_planes=16, in_planes2=16, out_planes=32,
    #                      kernel_size=3, padding=1, norm_type='gn', norm_group=16)
    N, in_planes, in_planes2, out_planes = 2, 16, 16, 32
    H = W = 16
    K, pad, groups = 3, 1, 16
    Cz = out_planes + in_planes2

    key = jax.random.PRNGKey(0)
    kx, kx2, kw1, kw2, kg1, kb1, kg2, kb2 = jax.random.split(key, 8)
    x = jax.random.normal(kx, (N, in_planes, H, W), jnp.float32)
    x2 = jax.random.normal(kx2, (N, in_planes2, H, W), jnp.float32)
    params = dict(
        gn1_gamma=1.0 + 0.1 * jax.random.normal(kg1, (in_planes,), jnp.float32),
        gn1_beta=0.1 * jax.random.normal(kb1, (in_planes,), jnp.float32),
        conv1_w=0.05 * jax.random.normal(kw1, (out_planes, in_planes, K, K), jnp.float32),
        gn2_gamma=1.0 + 0.1 * jax.random.normal(kg2, (Cz,), jnp.float32),
        gn2_beta=0.1 * jax.random.normal(kb2, (Cz,), jnp.float32),
        conv2_w=0.05 * jax.random.normal(kw2, (out_planes, Cz, K, K), jnp.float32),
    )

    out = inverted_cascade_layer(x, x2, params, num_groups=groups, padding=pad)
    out = jax.block_until_ready(out)

    ref = reference(x, x2, params, num_groups=groups, padding=pad)
    assert out.shape == (N, out_planes, H, W)
    err = float(jnp.max(jnp.abs(out - ref)))
    assert err < 2e-4, f"mismatch vs reference: {err}"

    print("KERNEL_OK")
</pallas_src>

<mosaic_0001>
module attributes {stable_mosaic.version = 11 : i64} {
  func.func @_inverted_cascade_kernel(%arg0: i32, %arg1: memref<1x16x256xf32, #tpu.memory_space<vmem>>, %arg2: memref<1x16x256xf32, #tpu.memory_space<vmem>>, %arg3: memref<1x256xi32, #tpu.memory_space<vmem>>, %arg4: memref<16x16xf32, #tpu.memory_space<vmem>>, %arg5: memref<16x1xf32, #tpu.memory_space<vmem>>, %arg6: memref<16x1xf32, #tpu.memory_space<vmem>>, %arg7: memref<32x144xf32, #tpu.memory_space<vmem>>, %arg8: memref<48x48xf32, #tpu.memory_space<vmem>>, %arg9: memref<48x1xf32, #tpu.memory_space<vmem>>, %arg10: memref<48x1xf32, #tpu.memory_space<vmem>>, %arg11: memref<32x432xf32, #tpu.memory_space<vmem>>, %arg12: memref<1x32x256xf32, #tpu.memory_space<vmem>>) attributes {dimension_semantics = [#tpu.dimension_semantics<parallel>], iteration_bounds = array<i64: 2>, scalar_prefetch = 0 : i64, scratch_operands = 0 : i64, tpu.core_type = #tpu.core_type<tc>, window_params = [{transform_indices = @transform_0, window_bounds = array<i64: 1, 16, 256>}, {transform_indices = @transform_1, window_bounds = array<i64: 1, 16, 256>}, {pipeline_mode = #tpu.pipeline_mode<synchronous>, transform_indices = @transform_2, window_bounds = array<i64: 1, 256>}, {pipeline_mode = #tpu.pipeline_mode<synchronous>, transform_indices = @transform_3, window_bounds = array<i64: 16, 16>}, {pipeline_mode = #tpu.pipeline_mode<synchronous>, transform_indices = @transform_4, window_bounds = array<i64: 16, 1>}, {pipeline_mode = #tpu.pipeline_mode<synchronous>, transform_indices = @transform_5, window_bounds = array<i64: 16, 1>}, {pipeline_mode = #tpu.pipeline_mode<synchronous>, transform_indices = @transform_6, window_bounds = array<i64: 32, 144>}, {pipeline_mode = #tpu.pipeline_mode<synchronous>, transform_indices = @transform_7, window_bounds = array<i64: 48, 48>}, {pipeline_mode = #tpu.pipeline_mode<synchronous>, transform_indices = @transform_8, window_bounds = array<i64: 48, 1>}, {pipeline_mode = #tpu.pipeline_mode<synchronous>, transform_indices = @transform_9, window_bounds = array<i64: 48, 1>}, {pipeline_mode = #tpu.pipeline_mode<synchronous>, transform_indices = @transform_10, window_bounds = array<i64: 32, 432>}, {transform_indices = @transform_11, window_bounds = array<i64: 1, 32, 256>}]} {
    %c0 = arith.constant 0 : index
    %c0_0 = arith.constant 0 : index
    %c0_1 = arith.constant 0 : index
    %0 = vector.load %arg1[%c0, %c0_0, %c0_1] : memref<1x16x256xf32, #tpu.memory_space<vmem>>, vector<1x16x256xf32>
    %1 = vector.shape_cast %0 : vector<1x16x256xf32> to vector<16x256xf32>
    %c0_2 = arith.constant 0 : index
    %c0_3 = arith.constant 0 : index
    %c0_4 = arith.constant 0 : index
    %2 = vector.load %arg2[%c0_2, %c0_3, %c0_4] : memref<1x16x256xf32, #tpu.memory_space<vmem>>, vector<1x16x256xf32>
    %3 = vector.shape_cast %2 : vector<1x16x256xf32> to vector<16x256xf32>
    %c0_5 = arith.constant 0 : index
    %c0_6 = arith.constant 0 : index
    %4 = vector.load %arg3[%c0_5, %c0_6] : memref<1x256xi32, #tpu.memory_space<vmem>>, vector<1x256xi32>
    %c0_7 = arith.constant 0 : index
    %c0_8 = arith.constant 0 : index
    %5 = vector.load %arg5[%c0_7, %c0_8] : memref<16x1xf32, #tpu.memory_space<vmem>>, vector<16x1xf32>
    %c0_9 = arith.constant 0 : index
    %c0_10 = arith.constant 0 : index
    %6 = vector.load %arg6[%c0_9, %c0_10] : memref<16x1xf32, #tpu.memory_space<vmem>>, vector<16x1xf32>
    %c0_11 = arith.constant 0 : index
    %c0_12 = arith.constant 0 : index
    %7 = vector.load %arg4[%c0_11, %c0_12] : memref<16x16xf32, #tpu.memory_space<vmem>>, vector<16x16xf32>
    %cst = arith.constant dense<0.000000e+00> : vector<16xf32>
    %8 = vector.multi_reduction <add>, %1, %cst [1] : vector<16x256xf32> to vector<16xf32>
    %9 = vector.shape_cast %8 : vector<16xf32> to vector<16x1xf32>
    %10 = arith.mulf %1, %1 : vector<16x256xf32>
    %cst_13 = arith.constant dense<0.000000e+00> : vector<16xf32>
    %11 = vector.multi_reduction <add>, %10, %cst_13 [1] : vector<16x256xf32> to vector<16xf32>
    %12 = vector.shape_cast %11 : vector<16xf32> to vector<16x1xf32>
    %13 = tpu.concatenate %9, %12 in 1 : vector<16x1xf32>, vector<16x1xf32> -> vector<16x2xf32>
    %cst_14 = arith.constant dense<0.000000e+00> : vector<16x2xf32>
    %14 = tpu.matmul %7, %13, %cst_14 {dimension_numbers = #tpu.dot_dimension_numbers<[1], [0], [0], [1], [0, 0, 1, 1], [], []>} : vector<16x16xf32>, vector<16x2xf32>, vector<16x2xf32> -> vector<16x2xf32>
    %15 = vector.extract_strided_slice %14 {offsets = [0, 0], sizes = [16, 1], strides = [1, 1]} : vector<16x2xf32> to vector<16x1xf32>
    %cst_15 = arith.constant 3.906250e-03 : f32
    %16 = vector.broadcast %cst_15 : f32 to vector<16x1xf32>
    %17 = arith.mulf %15, %16 : vector<16x1xf32>
    %18 = vector.extract_strided_slice %14 {offsets = [0, 1], sizes = [16, 1], strides = [1, 1]} : vector<16x2xf32> to vector<16x1xf32>
    %cst_16 = arith.constant 3.906250e-03 : f32
    %19 = vector.broadcast %cst_16 : f32 to vector<16x1xf32>
    %20 = arith.mulf %18, %19 : vector<16x1xf32>
    %21 = arith.mulf %17, %17 : vector<16x1xf32>
    %22 = arith.subf %20, %21 : vector<16x1xf32>
    %cst_17 = arith.constant 9.99999974E-6 : f32
    %23 = vector.broadcast %cst_17 : f32 to vector<16x1xf32>
    %24 = arith.addf %22, %23 : vector<16x1xf32>
    %25 = math.rsqrt %24 : vector<16x1xf32>
    %26 = arith.mulf %5, %25 : vector<16x1xf32>
    %27 = arith.mulf %17, %26 : vector<16x1xf32>
    %28 = arith.subf %6, %27 : vector<16x1xf32>
    %29 = vector.broadcast %26 : vector<16x1xf32> to vector<16x256xf32>
    %30 = arith.mulf %1, %29 : vector<16x256xf32>
    %31 = vector.broadcast %28 : vector<16x1xf32> to vector<16x256xf32>
    %32 = arith.addf %30, %31 : vector<16x256xf32>
    %cst_18 = arith.constant 0.000000e+00 : f32
    %33 = vector.broadcast %cst_18 : f32 to vector<16x256xf32>
    %34 = arith.maximumf %32, %33 : vector<16x256xf32>
    %c0_19 = arith.constant 0 : index
    %c0_20 = arith.constant 0 : index
    %35 = vector.load %arg7[%c0_19, %c0_20] : memref<32x144xf32, #tpu.memory_space<vmem>>, vector<32x144xf32>
    %cst_21 = arith.constant 0.000000e+00 : f32
    %36 = vector.broadcast %cst_21 : f32 to vector<16x17xf32>
    %37 = tpu.concatenate %36, %34, %36 in 1 : vector<16x17xf32>, vector<16x256xf32>, vector<16x17xf32> -> vector<16x290xf32>
    %38 = vector.extract_strided_slice %37 {offsets = [0, 0], sizes = [16, 256], strides = [1, 1]} : vector<16x290xf32> to vector<16x256xf32>
    %c1_i32 = arith.constant 1 : i32
    %39 = vector.broadcast %c1_i32 : i32 to vector<1x256xi32>
    %40 = arith.cmpi sge, %4, %39 : vector<1x256xi32>
    %cst_22 = arith.constant 0.000000e+00 : f32
    %41 = vector.shape_cast %40 : vector<1x256xi1> to vector<1x256xi1>
    %42 = vector.broadcast %41 : vector<1x256xi1> to vector<16x256xi1>
    %43 = vector.broadcast %cst_22 : f32 to vector<16x256xf32>
    %44 = arith.select %42, %38, %43 : vector<16x256xi1>, vector<16x256xf32>
    %45 = vector.extract_strided_slice %37 {offsets = [0, 1], sizes = [16, 256], strides = [1, 1]} : vector<16x290xf32> to vector<16x256xf32>
    %46 = vector.extract_strided_slice %37 {offsets = [0, 2], sizes = [16, 256], strides = [1, 1]} : vector<16x290xf32> to vector<16x256xf32>
    %c15_i32 = arith.constant 15 : i32
    %47 = vector.broadcast %c15_i32 : i32 to vector<1x256xi32>
    %48 = arith.cmpi slt, %4, %47 : vector<1x256xi32>
    %cst_23 = arith.constant 0.000000e+00 : f32
    %49 = vector.shape_cast %48 : vector<1x256xi1> to vector<1x256xi1>
    %50 = vector.broadcast %49 : vector<1x256xi1> to vector<16x256xi1>
    %51 = vector.broadcast %cst_23 : f32 to vector<16x256xf32>
    %52 = arith.select %50, %46, %51 : vector<16x256xi1>, vector<16x256xf32>
    %53 = vector.extract_strided_slice %37 {offsets = [0, 16], sizes = [16, 256], strides = [1, 1]} : vector<16x290xf32> to vector<16x256xf32>
    %c1_i32_24 = arith.constant 1 : i32
    %54 = vector.broadcast %c1_i32_24 : i32 to vector<1x256xi32>
    %55 = arith.cmpi sge, %4, %54 : vector<1x256xi32>
    %cst_25 = arith.constant 0.000000e+00 : f32
    %56 = vector.shape_cast %55 : vector<1x256xi1> to vector<1x256xi1>
    %57 = vector.broadcast %56 : vector<1x256xi1> to vector<16x256xi1>
    %58 = vector.broadcast %cst_25 : f32 to vector<16x256xf32>
    %59 = arith.select %57, %53, %58 : vector<16x256xi1>, vector<16x256xf32>
    %60 = vector.extract_strided_slice %37 {offsets = [0, 17], sizes = [16, 256], strides = [1, 1]} : vector<16x290xf32> to vector<16x256xf32>
    %61 = vector.extract_strided_slice %37 {offsets = [0, 18], sizes = [16, 256], strides = [1, 1]} : vector<16x290xf32> to vector<16x256xf32>
    %c15_i32_26 = arith.constant 15 : i32
    %62 = vector.broadcast %c15_i32_26 : i32 to vector<1x256xi32>
    %63 = arith.cmpi slt, %4, %62 : vector<1x256xi32>
    %cst_27 = arith.constant 0.000000e+00 : f32
    %64 = vector.shape_cast %63 : vector<1x256xi1> to vector<1x256xi1>
    %65 = vector.broadcast %64 : vector<1x256xi1> to vector<16x256xi1>
    %66 = vector.broadcast %cst_27 : f32 to vector<16x256xf32>
    %67 = arith.select %65, %61, %66 : vector<16x256xi1>, vector<16x256xf32>
    %68 = vector.extract_strided_slice %37 {offsets = [0, 32], sizes = [16, 256], strides = [1, 1]} : vector<16x290xf32> to vector<16x256xf32>
    %c1_i32_28 = arith.constant 1 : i32
    %69 = vector.broadcast %c1_i32_28 : i32 to vector<1x256xi32>
    %70 = arith.cmpi sge, %4, %69 : vector<1x256xi32>
    %cst_29 = arith.constant 0.000000e+00 : f32
    %71 = vector.shape_cast %70 : vector<1x256xi1> to vector<1x256xi1>
    %72 = vector.broadcast %71 : vector<1x256xi1> to vector<16x256xi1>
    %73 = vector.broadcast %cst_29 : f32 to vector<16x256xf32>
    %74 = arith.select %72, %68, %73 : vector<16x256xi1>, vector<16x256xf32>
    %75 = vector.extract_strided_slice %37 {offsets = [0, 33], sizes = [16, 256], strides = [1, 1]} : vector<16x290xf32> to vector<16x256xf32>
    %76 = vector.extract_strided_slice %37 {offsets = [0, 34], sizes = [16, 256], strides = [1, 1]} : vector<16x290xf32> to vector<16x256xf32>
    %c15_i32_30 = arith.constant 15 : i32
    %77 = vector.broadcast %c15_i32_30 : i32 to vector<1x256xi32>
    %78 = arith.cmpi slt, %4, %77 : vector<1x256xi32>
    %cst_31 = arith.constant 0.000000e+00 : f32
    %79 = vector.shape_cast %78 : vector<1x256xi1> to vector<1x256xi1>
    %80 = vector.broadcast %79 : vector<1x256xi1> to vector<16x256xi1>
    %81 = vector.broadcast %cst_31 : f32 to vector<16x256xf32>
    %82 = arith.select %80, %76, %81 : vector<16x256xi1>, vector<16x256xf32>
    %83 = tpu.concatenate %44, %45, %52, %59, %60, %67, %74, %75, %82 in 0 : vector<16x256xf32>, vector<16x256xf32>, vector<16x256xf32>, vector<16x256xf32>, vector<16x256xf32>, vector<16x256xf32>, vector<16x256xf32>, vector<16x256xf32>, vector<16x256xf32> -> vector<144x256xf32>
    %cst_32 = arith.constant dense<0.000000e+00> : vector<32x256xf32>
    %84 = tpu.matmul %35, %83, %cst_32 {dimension_numbers = #tpu.dot_dimension_numbers<[1], [0], [0], [1], [0, 0, 1, 1], [], []>} : vector<32x144xf32>, vector<144x256xf32>, vector<32x256xf32> -> vector<32x256xf32>
    %85 = vector.extract_strided_slice %84 {offsets = [0, 0], sizes = [16, 256], strides = [1, 1]} : vector<32x256xf32> to vector<16x256xf32>
    %86 = arith.addf %85, %1 : vector<16x256xf32>
    %87 = vector.extract_strided_slice %84 {offsets = [16, 0], sizes = [16, 256], strides = [1, 1]} : vector<32x256xf32> to vector<16x256xf32>
    %88 = tpu.concatenate %86, %87 in 0 : vector<16x256xf32>, vector<16x256xf32> -> vector<32x256xf32>
    %89 = tpu.concatenate %88, %3 in 0 : vector<32x256xf32>, vector<16x256xf32> -> vector<48x256xf32>
    %c0_33 = arith.constant 0 : index
    %c0_34 = arith.constant 0 : index
    %90 = vector.load %arg9[%c0_33, %c0_34] : memref<48x1xf32, #tpu.memory_space<vmem>>, vector<48x1xf32>
    %c0_35 = arith.constant 0 : index
    %c0_36 = arith.constant 0 : index
    %91 = vector.load %arg10[%c0_35, %c0_36] : memref<48x1xf32, #tpu.memory_space<vmem>>, vector<48x1xf32>
    %c0_37 = arith.constant 0 : index
    %c0_38 = arith.constant 0 : index
    %92 = vector.load %arg8[%c0_37, %c0_38] : memref<48x48xf32, #tpu.memory_space<vmem>>, vector<48x48xf32>
    %cst_39 = arith.constant dense<0.000000e+00> : vector<48xf32>
    %93 = vector.multi_reduction <add>, %89, %cst_39 [1] : vector<48x256xf32> to vector<48xf32>
    %94 = vector.shape_cast %93 : vector<48xf32> to vector<48x1xf32>
    %95 = arith.mulf %89, %89 : vector<48x256xf32>
    %cst_40 = arith.constant dense<0.000000e+00> : vector<48xf32>
    %96 = vector.multi_reduction <add>, %95, %cst_40 [1] : vector<48x256xf32> to vector<48xf32>
    %97 = vector.shape_cast %96 : vector<48xf32> to vector<48x1xf32>
    %98 = tpu.concatenate %94, %97 in 1 : vector<48x1xf32>, vector<48x1xf32> -> vector<48x2xf32>
    %cst_41 = arith.constant dense<0.000000e+00> : vector<48x2xf32>
    %99 = tpu.matmul %92, %98, %cst_41 {dimension_numbers = #tpu.dot_dimension_numbers<[1], [0], [0], [1], [0, 0, 1, 1], [], []>} : vector<48x48xf32>, vector<48x2xf32>, vector<48x2xf32> -> vector<48x2xf32>
    %100 = vector.extract_strided_slice %99 {offsets = [0, 0], sizes = [48, 1], strides = [1, 1]} : vector<48x2xf32> to vector<48x1xf32>
    %cst_42 = arith.constant 0.00130208337 : f32
    %101 = vector.broadcast %cst_42 : f32 to vector<48x1xf32>
    %102 = arith.mulf %100, %101 : vector<48x1xf32>
    %103 = vector.extract_strided_slice %99 {offsets = [0, 1], sizes = [48, 1], strides = [1, 1]} : vector<48x2xf32> to vector<48x1xf32>
    %cst_43 = arith.constant 0.00130208337 : f32
    %104 = vector.broadcast %cst_43 : f32 to vector<48x1xf32>
    %105 = arith.mulf %103, %104 : vector<48x1xf32>
    %106 = arith.mulf %102, %102 : vector<48x1xf32>
    %107 = arith.subf %105, %106 : vector<48x1xf32>
    %cst_44 = arith.constant 9.99999974E-6 : f32
    %108 = vector.broadcast %cst_44 : f32 to vector<48x1xf32>
    %109 = arith.addf %107, %108 : vector<48x1xf32>
    %110 = math.rsqrt %109 : vector<48x1xf32>
    %111 = arith.mulf %90, %110 : vector<48x1xf32>
    %112 = arith.mulf %102, %111 : vector<48x1xf32>
    %113 = arith.subf %91, %112 : vector<48x1xf32>
    %114 = vector.broadcast %111 : vector<48x1xf32> to vector<48x256xf32>
    %115 = arith.mulf %89, %114 : vector<48x256xf32>
    %116 = vector.broadcast %113 : vector<48x1xf32> to vector<48x256xf32>
    %117 = arith.addf %115, %116 : vector<48x256xf32>
    %cst_45 = arith.constant 0.000000e+00 : f32
    %118 = vector.broadcast %cst_45 : f32 to vector<48x256xf32>
    %119 = arith.maximumf %117, %118 : vector<48x256xf32>
    %c0_46 = arith.constant 0 : index
    %c0_47 = arith.constant 0 : index
    %120 = vector.load %arg11[%c0_46, %c0_47] : memref<32x432xf32, #tpu.memory_space<vmem>>, vector<32x432xf32>
    %cst_48 = arith.constant 0.000000e+00 : f32
    %121 = vector.broadcast %cst_48 : f32 to vector<48x17xf32>
    %122 = tpu.concatenate %121, %119, %121 in 1 : vector<48x17xf32>, vector<48x256xf32>, vector<48x17xf32> -> vector<48x290xf32>
    %123 = vector.extract_strided_slice %122 {offsets = [0, 0], sizes = [48, 256], strides = [1, 1]} : vector<48x290xf32> to vector<48x256xf32>
    %c1_i32_49 = arith.constant 1 : i32
    %124 = vector.broadcast %c1_i32_49 : i32 to vector<1x256xi32>
    %125 = arith.cmpi sge, %4, %124 : vector<1x256xi32>
    %cst_50 = arith.constant 0.000000e+00 : f32
    %126 = vector.shape_cast %125 : vector<1x256xi1> to vector<1x256xi1>
    %127 = vector.broadcast %126 : vector<1x256xi1> to vector<48x256xi1>
    %128 = vector.broadcast %cst_50 : f32 to vector<48x256xf32>
    %129 = arith.select %127, %123, %128 : vector<48x256xi1>, vector<48x256xf32>
    %130 = vector.extract_strided_slice %122 {offsets = [0, 1], sizes = [48, 256], strides = [1, 1]} : vector<48x290xf32> to vector<48x256xf32>
    %131 = vector.extract_strided_slice %122 {offsets = [0, 2], sizes = [48, 256], strides = [1, 1]} : vector<48x290xf32> to vector<48x256xf32>
    %c15_i32_51 = arith.constant 15 : i32
    %132 = vector.broadcast %c15_i32_51 : i32 to vector<1x256xi32>
    %133 = arith.cmpi slt, %4, %132 : vector<1x256xi32>
    %cst_52 = arith.constant 0.000000e+00 : f32
    %134 = vector.shape_cast %133 : vector<1x256xi1> to vector<1x256xi1>
    %135 = vector.broadcast %134 : vector<1x256xi1> to vector<48x256xi1>
    %136 = vector.broadcast %cst_52 : f32 to vector<48x256xf32>
    %137 = arith.select %135, %131, %136 : vector<48x256xi1>, vector<48x256xf32>
    %138 = vector.extract_strided_slice %122 {offsets = [0, 16], sizes = [48, 256], strides = [1, 1]} : vector<48x290xf32> to vector<48x256xf32>
    %c1_i32_53 = arith.constant 1 : i32
    %139 = vector.broadcast %c1_i32_53 : i32 to vector<1x256xi32>
    %140 = arith.cmpi sge, %4, %139 : vector<1x256xi32>
    %cst_54 = arith.constant 0.000000e+00 : f32
    %141 = vector.shape_cast %140 : vector<1x256xi1> to vector<1x256xi1>
    %142 = vector.broadcast %141 : vector<1x256xi1> to vector<48x256xi1>
    %143 = vector.broadcast %cst_54 : f32 to vector<48x256xf32>
    %144 = arith.select %142, %138, %143 : vector<48x256xi1>, vector<48x256xf32>
    %145 = vector.extract_strided_slice %122 {offsets = [0, 17], sizes = [48, 256], strides = [1, 1]} : vector<48x290xf32> to vector<48x256xf32>
    %146 = vector.extract_strided_slice %122 {offsets = [0, 18], sizes = [48, 256], strides = [1, 1]} : vector<48x290xf32> to vector<48x256xf32>
    %c15_i32_55 = arith.constant 15 : i32
    %147 = vector.broadcast %c15_i32_55 : i32 to vector<1x256xi32>
    %148 = arith.cmpi slt, %4, %147 : vector<1x256xi32>
    %cst_56 = arith.constant 0.000000e+00 : f32
    %149 = vector.shape_cast %148 : vector<1x256xi1> to vector<1x256xi1>
    %150 = vector.broadcast %149 : vector<1x256xi1> to vector<48x256xi1>
    %151 = vector.broadcast %cst_56 : f32 to vector<48x256xf32>
    %152 = arith.select %150, %146, %151 : vector<48x256xi1>, vector<48x256xf32>
    %153 = vector.extract_strided_slice %122 {offsets = [0, 32], sizes = [48, 256], strides = [1, 1]} : vector<48x290xf32> to vector<48x256xf32>
    %c1_i32_57 = arith.constant 1 : i32
    %154 = vector.broadcast %c1_i32_57 : i32 to vector<1x256xi32>
    %155 = arith.cmpi sge, %4, %154 : vector<1x256xi32>
    %cst_58 = arith.constant 0.000000e+00 : f32
    %156 = vector.shape_cast %155 : vector<1x256xi1> to vector<1x256xi1>
    %157 = vector.broadcast %156 : vector<1x256xi1> to vector<48x256xi1>
    %158 = vector.broadcast %cst_58 : f32 to vector<48x256xf32>
    %159 = arith.select %157, %153, %158 : vector<48x256xi1>, vector<48x256xf32>
    %160 = vector.extract_strided_slice %122 {offsets = [0, 33], sizes = [48, 256], strides = [1, 1]} : vector<48x290xf32> to vector<48x256xf32>
    %161 = vector.extract_strided_slice %122 {offsets = [0, 34], sizes = [48, 256], strides = [1, 1]} : vector<48x290xf32> to vector<48x256xf32>
    %c15_i32_59 = arith.constant 15 : i32
    %162 = vector.broadcast %c15_i32_59 : i32 to vector<1x256xi32>
    %163 = arith.cmpi slt, %4, %162 : vector<1x256xi32>
    %cst_60 = arith.constant 0.000000e+00 : f32
    %164 = vector.shape_cast %163 : vector<1x256xi1> to vector<1x256xi1>
    %165 = vector.broadcast %164 : vector<1x256xi1> to vector<48x256xi1>
    %166 = vector.broadcast %cst_60 : f32 to vector<48x256xf32>
    %167 = arith.select %165, %161, %166 : vector<48x256xi1>, vector<48x256xf32>
    %168 = tpu.concatenate %129, %130, %137, %144, %145, %152, %159, %160, %167 in 0 : vector<48x256xf32>, vector<48x256xf32>, vector<48x256xf32>, vector<48x256xf32>, vector<48x256xf32>, vector<48x256xf32>, vector<48x256xf32>, vector<48x256xf32>, vector<48x256xf32> -> vector<432x256xf32>
    %cst_61 = arith.constant dense<0.000000e+00> : vector<32x256xf32>
    %169 = tpu.matmul %120, %168, %cst_61 {dimension_numbers = #tpu.dot_dimension_numbers<[1], [0], [0], [1], [0, 0, 1, 1], [], []>} : vector<32x432xf32>, vector<432x256xf32>, vector<32x256xf32> -> vector<32x256xf32>
    %170 = vector.extract_strided_slice %169 {offsets = [0, 0], sizes = [16, 256], strides = [1, 1]} : vector<32x256xf32> to vector<16x256xf32>
    %171 = arith.addf %170, %1 : vector<16x256xf32>
    %172 = vector.extract_strided_slice %169 {offsets = [16, 0], sizes = [16, 256], strides = [1, 1]} : vector<32x256xf32> to vector<16x256xf32>
    %173 = tpu.concatenate %171, %172 in 0 : vector<16x256xf32>, vector<16x256xf32> -> vector<32x256xf32>
    %c0_62 = arith.constant 0 : index
    %c0_63 = arith.constant 0 : index
    %c0_64 = arith.constant 0 : index
    %174 = vector.load %arg12[%c0_62, %c0_63, %c0_64] : memref<1x32x256xf32, #tpu.memory_space<vmem>>, vector<1x32x256xf32>
    %175 = vector.shape_cast %174 : vector<1x32x256xf32> to vector<32x256xf32>
    %176 = vector.shape_cast %173 : vector<32x256xf32> to vector<1x32x256xf32>
    tpu.vector_store %arg12[%c0_62, %c0_63, %c0_64], %176 {strides = array<i32>} : memref<1x32x256xf32, #tpu.memory_space<vmem>>, vector<1x32x256xf32>,
    return
  }
  func.func @transform_0(%arg0: i32) -> (i32, i32, i32) {
    %c0_i32 = arith.constant 0 : i32
    %c0_i32_0 = arith.constant 0 : i32
    %c0_i32_1 = arith.constant 0 : i32
    return %arg0, %c0_i32, %c0_i32_0 : i32, i32, i32
  }
  func.func @transform_1(%arg0: i32) -> (i32, i32, i32) {
    %c0_i32 = arith.constant 0 : i32
    %c0_i32_0 = arith.constant 0 : i32
    %c0_i32_1 = arith.constant 0 : i32
    return %arg0, %c0_i32, %c0_i32_0 : i32, i32, i32
  }
  func.func @transform_2(%arg0: i32) -> (i32, i32) {
    %c0_i32 = arith.constant 0 : i32
    %c0_i32_0 = arith.constant 0 : i32
    %c0_i32_1 = arith.constant 0 : i32
    return %c0_i32, %c0_i32_0 : i32, i32
  }
  func.func @transform_3(%arg0: i32) -> (i32, i32) {
    %c0_i32 = arith.constant 0 : i32
    %c0_i32_0 = arith.constant 0 : i32
    %c0_i32_1 = arith.constant 0 : i32
    return %c0_i32, %c0_i32_0 : i32, i32
  }
  func.func @transform_4(%arg0: i32) -> (i32, i32) {
    %c0_i32 = arith.constant 0 : i32
    %c0_i32_0 = arith.constant 0 : i32
    %c0_i32_1 = arith.constant 0 : i32
    return %c0_i32, %c0_i32_0 : i32, i32
  }
  func.func @transform_5(%arg0: i32) -> (i32, i32) {
    %c0_i32 = arith.constant 0 : i32
    %c0_i32_0 = arith.constant 0 : i32
    %c0_i32_1 = arith.constant 0 : i32
    return %c0_i32, %c0_i32_0 : i32, i32
  }
  func.func @transform_6(%arg0: i32) -> (i32, i32) {
    %c0_i32 = arith.constant 0 : i32
    %c0_i32_0 = arith.constant 0 : i32
    %c0_i32_1 = arith.constant 0 : i32
    return %c0_i32, %c0_i32_0 : i32, i32
  }
  func.func @transform_7(%arg0: i32) -> (i32, i32) {
    %c0_i32 = arith.constant 0 : i32
    %c0_i32_0 = arith.constant 0 : i32
    %c0_i32_1 = arith.constant 0 : i32
    return %c0_i32, %c0_i32_0 : i32, i32
  }
  func.func @transform_8(%arg0: i32) -> (i32, i32) {
    %c0_i32 = arith.constant 0 : i32
    %c0_i32_0 = arith.constant 0 : i32
    %c0_i32_1 = arith.constant 0 : i32
    return %c0_i32, %c0_i32_0 : i32, i32
  }
  func.func @transform_9(%arg0: i32) -> (i32, i32) {
    %c0_i32 = arith.constant 0 : i32
    %c0_i32_0 = arith.constant 0 : i32
    %c0_i32_1 = arith.constant 0 : i32
    return %c0_i32, %c0_i32_0 : i32, i32
  }
  func.func @transform_10(%arg0: i32) -> (i32, i32) {
    %c0_i32 = arith.constant 0 : i32
    %c0_i32_0 = arith.constant 0 : i32
    %c0_i32_1 = arith.constant 0 : i32
    return %c0_i32, %c0_i32_0 : i32, i32
  }
  func.func @transform_11(%arg0: i32) -> (i32, i32, i32) {
    %c0_i32 = arith.constant 0 : i32
    %c0_i32_0 = arith.constant 0 : i32
    %c0_i32_1 = arith.constant 0 : i32
    return %arg0, %c0_i32, %c0_i32_0 : i32, i32, i32
  }
}

</mosaic_0001>

<llo_original>
// kernel: tpu_custom_call.1
$region0: #{tpu_custom_call.1}
  #allocation0 [shape = 'u32[]', space=smem, size = 0x4, offset = 0x4, fixed_abs, tag = 'smem constant byte address 0x4 - core index']
  #allocation1 [shape = 'u32[144,128]{1,0:T(1,128)}', space=vmem, size = 0x12000, scoped, tag = 'internal scratch']
  %s0 = inlined_call_operand.hbm [shape: f32[2,16,256], index: 0, kind: input, shape index: {}]
  %s1 = inlined_call_operand.hbm [shape: f32[2,16,256], index: 1, kind: input, shape index: {}]
  %s2 = inlined_call_operand.vmem [shape: s32[1,256], index: 2, kind: input, shape index: {}]
  %s3 = inlined_call_operand.vmem [shape: f32[16,16], index: 3, kind: input, shape index: {}]
  %s4 = inlined_call_operand.vmem [shape: f32[16,1], index: 4, kind: input, shape index: {}]
  %s5 = inlined_call_operand.vmem [shape: f32[16,1], index: 5, kind: input, shape index: {}]
  %s6 = inlined_call_operand.hbm [shape: f32[32,144], index: 6, kind: input, shape index: {}]
  %s7 = inlined_call_operand.hbm [shape: f32[48,48], index: 7, kind: input, shape index: {}]
  %s8 = inlined_call_operand.vmem [shape: f32[48,1], index: 8, kind: input, shape index: {}]
  %s9 = inlined_call_operand.vmem [shape: f32[48,1], index: 9, kind: input, shape index: {}]
  %s10 = inlined_call_operand.vmem [shape: f32[32,432], index: 10, kind: input, shape index: {}]
  %s11 = inlined_call_operand.hbm [shape: f32[2,32,256], index: 11, kind: output, shape index: {}]
  %s12 = sld [smem:[#allocation0]]
  $region93: #{tpu_custom_call.1} parent=0
    _
  %s14 = ssub.s32 1, %s12
  %s15 = scalar_select 0, %s14, %s12
  $region1: #{tpu_custom_call.1} parent=0
    #allocation2 [shape = 'u8[32768]{0}', space=vmem, size = 0x8000, scoped, tag = 'input window, operand 0']
    #allocation3 [shape = 's32[2]{0}', space=sflag, size = 0x8, scoped, tag = 'scoped memory for tpu_custom_call.1']
    #allocation4 [shape = 's32[2]{0}', space=sflag, size = 0x8, scoped, tag = 'scoped memory for tpu_custom_call.1']
    #allocation5 [shape = 'u8[32768]{0}', space=vmem, size = 0x8000, scoped, tag = 'input window, operand 1']
    #allocation6 [shape = 's32[2]{0}', space=sflag, size = 0x8, scoped, tag = 'scoped memory for tpu_custom_call.1']
    #allocation7 [shape = 'u8[32768]{0}', space=vmem, size = 0x8000, scoped, tag = 'input window, operand 6, single buffered']
    #allocation8 [shape = 'u8[24576]{0}', space=vmem, size = 0x6000, scoped, tag = 'input window, operand 7, single buffered']
    #allocation9 [shape = 's32[1]{0}', space=sflag, size = 0x4, scoped, tag = 'scoped memory for tpu_custom_call.1']
    #allocation10 [shape = 'u8[65536]{0}', space=vmem, size = 0x10000, scoped, tag = 'output window, operand 0']
    %16 = vsyncpa [#allocation3], 0
    %s17 = scalar_lea.sflag [#allocation3], 1
    %18 = vsyncpa %s17, 0
    %19 = vsyncpa [#allocation6], 0
    %s20 = scalar_lea.sflag [#allocation6], 1
    %21 = vsyncpa %s20, 0
    %22 = vsyncpa [#allocation9], 0
    %23 = vsyncpa [#allocation4], 0
    %s24 = scalar_lea.sflag [#allocation4], 1
    %25 = vsyncpa %s24, 0
    loop: start=0, step=1, limit=4
    $region2: #{tpu_custom_call.1} parent=1 // loop_pre_header
      _
    $region3: #{tpu_custom_call.1} parent=1 // loop_header
      %s27 = sphi 0, %s31
      %p28 = scmp.ge.s32.totalorder %s27, 4
      %s37 = sphi 0, %s39
      %s40 = sphi 0, %s37
      %s41 = sphi 0, %s40
      %s57 = sphi 0, %s41
      %s63 = sphi 0, %s65
      %s66 = sphi 0, %s63
      %s67 = sphi 0, %s66
      %s83 = sphi 0, %s67
      %s87 = sphi 0, %s87
      %s89 = sphi 0, %s87
      %s90 = sphi 0, %s89
      %s104 = sphi 0, %s90
      %s108 = sphi 0, %s108
      %s110 = sphi 0, %s108
      %s111 = sphi 0, %s110
      %s125 = sphi 0, %s111
      %s129 = sphi 0, %s129
      %s131 = sphi 0, %s129
      %s132 = sphi 0, %s131
      %s146 = sphi 0, %s132
      %s150 = sphi 0, %s150
      %s152 = sphi 0, %s150
      %s153 = sphi 0, %s152
      %s167 = sphi 0, %s153
      %s171 = sphi 0, %s171
      %s173 = sphi 0, %s171
      %s174 = sphi 0, %s173
      %s188 = sphi 0, %s174
      %s192 = sphi 0, %s192
      %s194 = sphi 0, %s192
      %s195 = sphi 0, %s194
      %s209 = sphi 0, %s195
      %s213 = sphi 0, %s213
      %s215 = sphi 0, %s213
      %s216 = sphi 0, %s215
      %s230 = sphi 0, %s216
      %s234 = sphi 0, %s234
      %s236 = sphi 0, %s234
      %s237 = sphi 0, %s236
      %s251 = sphi 0, %s237
      %s255 = sphi 0, %s255
      %s257 = sphi 0, %s255
      %s258 = sphi 0, %s257
      %s272 = sphi 0, %s258
      %s278 = sphi 0, %s280
      %s281 = sphi 0, %s278
      %s282 = sphi 0, %s281
      %s298 = sphi 0, %s282
    $region4: #{tpu_custom_call.1} parent=1 // loop_header_branch
      %30 = sbr.rel (%p28) target = $region8
    $region5: #{tpu_custom_call.1} parent=1 // loop_body
      %s32 = ssub.s32 %s27, 1
      %s33 = ssub.s32 %s27, 2
      %s34 = sadd.s32 %s27, 1
      %s35 = ssub.s32 %s27, %s34
      %p36 = scmp.eq.s32.totalorder %s35, 0
      %s38 = sadd.s32 %s37, 1
      %s39 = scalar_select %p36, %s37, %s38
      %p42 = pneg %p36
      %p43 = scmp.eq.s32.totalorder %s27, 1
      %p44 = por %p42, %p43
      %p45 = scmp.ne.s32.totalorder %s37, %s40
      %p46 = scmp.eq.s32.totalorder %s27, 0
      %p47 = por %p45, %p46
      %p48 = scmp.ne.s32.totalorder %s37, %s40
      %p49 = scmp.eq.s32.totalorder %s32, 1
      %p50 = por %p48, %p49
      %p51 = scmp.ne.s32.totalorder %s40, %s41
      %p52 = scmp.eq.s32.totalorder %s32, 0
      %p53 = por %p51, %p52
      %p54 = scmp.ne.s32.totalorder %s40, %s41
      %p55 = scmp.eq.s32.totalorder %s33, 1
      %p56 = por %p54, %p55
      %p58 = scmp.ne.s32.totalorder %s41, %s57
      %p59 = scmp.eq.s32.totalorder %s33, 0
      %p60 = por %p58, %p59
      %s61 = ssub.s32 %s27, %s34
      %p62 = scmp.eq.s32.totalorder %s61, 0
      %s64 = sadd.s32 %s63, 1
      %s65 = scalar_select %p62, %s63, %s64
      %p68 = pneg %p62
      %p69 = scmp.eq.s32.totalorder %s27, 1
      %p70 = por %p68, %p69
      %p71 = scmp.ne.s32.totalorder %s63, %s66
      %p72 = scmp.eq.s32.totalorder %s27, 0
      %p73 = por %p71, %p72
      %p74 = scmp.ne.s32.totalorder %s63, %s66
      %p75 = scmp.eq.s32.totalorder %s32, 1
      %p76 = por %p74, %p75
      %p77 = scmp.ne.s32.totalorder %s66, %s67
      %p78 = scmp.eq.s32.totalorder %s32, 0
      %p79 = por %p77, %p78
      %p80 = scmp.ne.s32.totalorder %s66, %s67
      %p81 = scmp.eq.s32.totalorder %s33, 1
      %p82 = por %p80, %p81
      %p84 = scmp.ne.s32.totalorder %s67, %s83
      %p85 = scmp.eq.s32.totalorder %s33, 0
      %p86 = por %p84, %p85
      %s88 = sadd.s32 %s87, 1
      %p91 = scmp.eq.s32.totalorder %s27, 1
      %p92 = scmp.ne.s32.totalorder %s87, %s89
      %p93 = scmp.eq.s32.totalorder %s27, 0
      %p94 = por %p92, %p93
      %p95 = scmp.ne.s32.totalorder %s87, %s89
      %p96 = scmp.eq.s32.totalorder %s32, 1
      %p97 = por %p95, %p96
      %p98 = scmp.ne.s32.totalorder %s89, %s90
      %p99 = scmp.eq.s32.totalorder %s32, 0
      %p100 = por %p98, %p99
      %p101 = scmp.ne.s32.totalorder %s89, %s90
      %p102 = scmp.eq.s32.totalorder %s33, 1
      %p103 = por %p101, %p102
      %p105 = scmp.ne.s32.totalorder %s90, %s104
      %p106 = scmp.eq.s32.totalorder %s33, 0
      %p107 = por %p105, %p106
      %s109 = sadd.s32 %s108, 1
      %p112 = scmp.eq.s32.totalorder %s27, 1
      %p113 = scmp.ne.s32.totalorder %s108, %s110
      %p114 = scmp.eq.s32.totalorder %s27, 0
      %p115 = por %p113, %p114
      %p116 = scmp.ne.s32.totalorder %s108, %s110
      %p117 = scmp.eq.s32.totalorder %s32, 1
      %p118 = por %p116, %p117
      %p119 = scmp.ne.s32.totalorder %s110, %s111
      %p120 = scmp.eq.s32.totalorder %s32, 0
      %p121 = por %p119, %p120
      %p122 = scmp.ne.s32.totalorder %s110, %s111
      %p123 = scmp.eq.s32.totalorder %s33, 1
      %p124 = por %p122, %p123
      %p126 = scmp.ne.s32.totalorder %s111, %s125
      %p127 = scmp.eq.s32.totalorder %s33, 0
      %p128 = por %p126, %p127
      %s130 = sadd.s32 %s129, 1
      %p133 = scmp.eq.s32.totalorder %s27, 1
      %p134 = scmp.ne.s32.totalorder %s129, %s131
      %p135 = scmp.eq.s32.totalorder %s27, 0
      %p136 = por %p134, %p135
      %p137 = scmp.ne.s32.totalorder %s129, %s131
      %p138 = scmp.eq.s32.totalorder %s32, 1
      %p139 = por %p137, %p138
      %p140 = scmp.ne.s32.totalorder %s131, %s132
      %p141 = scmp.eq.s32.totalorder %s32, 0
      %p142 = por %p140, %p141
      %p143 = scmp.ne.s32.totalorder %s131, %s132
      %p144 = scmp.eq.s32.totalorder %s33, 1
      %p145 = por %p143, %p144
      %p147 = scmp.ne.s32.totalorder %s132, %s146
      %p148 = scmp.eq.s32.totalorder %s33, 0
      %p149 = por %p147, %p148
      %s151 = sadd.s32 %s150, 1
      %p154 = scmp.eq.s32.totalorder %s27, 1
      %p155 = scmp.ne.s32.totalorder %s150, %s152
      %p156 = scmp.eq.s32.totalorder %s27, 0
      %p157 = por %p155, %p156
      %p158 = scmp.ne.s32.totalorder %s150, %s152
      %p159 = scmp.eq.s32.totalorder %s32, 1
      %p160 = por %p158, %p159
      %p161 = scmp.ne.s32.totalorder %s152, %s153
      %p162 = scmp.eq.s32.totalorder %s32, 0
      %p163 = por %p161, %p162
      %p164 = scmp.ne.s32.totalorder %s152, %s153
      %p165 = scmp.eq.s32.totalorder %s33, 1
      %p166 = por %p164, %p165
      %p168 = scmp.ne.s32.totalorder %s153, %s167
      %p169 = scmp.eq.s32.totalorder %s33, 0
      %p170 = por %p168, %p169
      %s172 = sadd.s32 %s171, 1
      %p175 = scmp.eq.s32.totalorder %s27, 1
      %p176 = scmp.ne.s32.totalorder %s171, %s173
      %p177 = scmp.eq.s32.totalorder %s27, 0
      %p178 = por %p176, %p177
      %p179 = scmp.ne.s32.totalorder %s171, %s173
      %p180 = scmp.eq.s32.totalorder %s32, 1
      %p181 = por %p179, %p180
      %p182 = scmp.ne.s32.totalorder %s173, %s174
      %p183 = scmp.eq.s32.totalorder %s32, 0
      %p184 = por %p182, %p183
      %p185 = scmp.ne.s32.totalorder %s173, %s174
      %p186 = scmp.eq.s32.totalorder %s33, 1
      %p187 = por %p185, %p186
      %p189 = scmp.ne.s32.totalorder %s174, %s188
      %p190 = scmp.eq.s32.totalorder %s33, 0
      %p191 = por %p189, %p190
      %s193 = sadd.s32 %s192, 1
      %p196 = scmp.eq.s32.totalorder %s27, 1
      %p197 = scmp.ne.s32.totalorder %s192, %s194
      %p198 = scmp.eq.s32.totalorder %s27, 0
      %p199 = por %p197, %p198
      %p200 = scmp.ne.s32.totalorder %s192, %s194
      %p201 = scmp.eq.s32.totalorder %s32, 1
      %p202 = por %p200, %p201
      %p203 = scmp.ne.s32.totalorder %s194, %s195
      %p204 = scmp.eq.s32.totalorder %s32, 0
      %p205 = por %p203, %p204
      %p206 = scmp.ne.s32.totalorder %s194, %s195
      %p207 = scmp.eq.s32.totalorder %s33, 1
      %p208 = por %p206, %p207
      %p210 = scmp.ne.s32.totalorder %s195, %s209
      %p211 = scmp.eq.s32.totalorder %s33, 0
      %p212 = por %p210, %p211
      %s214 = sadd.s32 %s213, 1
      %p217 = scmp.eq.s32.totalorder %s27, 1
      %p218 = scmp.ne.s32.totalorder %s213, %s215
      %p219 = scmp.eq.s32.totalorder %s27, 0
      %p220 = por %p218, %p219
      %p221 = scmp.ne.s32.totalorder %s213, %s215
      %p222 = scmp.eq.s32.totalorder %s32, 1
      %p223 = por %p221, %p222
      %p224 = scmp.ne.s32.totalorder %s215, %s216
      %p225 = scmp.eq.s32.totalorder %s32, 0
      %p226 = por %p224, %p225
      %p227 = scmp.ne.s32.totalorder %s215, %s216
      %p228 = scmp.eq.s32.totalorder %s33, 1
      %p229 = por %p227, %p228
      %p231 = scmp.ne.s32.totalorder %s216, %s230
      %p232 = scmp.eq.s32.totalorder %s33, 0
      %p233 = por %p231, %p232
      %s235 = sadd.s32 %s234, 1
      %p238 = scmp.eq.s32.totalorder %s27, 1
      %p239 = scmp.ne.s32.totalorder %s234, %s236
      %p240 = scmp.eq.s32.totalorder %s27, 0
      %p241 = por %p239, %p240
      %p242 = scmp.ne.s32.totalorder %s234, %s236
      %p243 = scmp.eq.s32.totalorder %s32, 1
      %p244 = por %p242, %p243
      %p245 = scmp.ne.s32.totalorder %s236, %s237
      %p246 = scmp.eq.s32.totalorder %s32, 0
      %p247 = por %p245, %p246
      %p248 = scmp.ne.s32.totalorder %s236, %s237
      %p249 = scmp.eq.s32.totalorder %s33, 1
      %p250 = por %p248, %p249
      %p252 = scmp.ne.s32.totalorder %s237, %s251
      %p253 = scmp.eq.s32.totalorder %s33, 0
      %p254 = por %p252, %p253
      %s256 = sadd.s32 %s255, 1
      %p259 = scmp.eq.s32.totalorder %s27, 1
      %p260 = scmp.ne.s32.totalorder %s255, %s257
      %p261 = scmp.eq.s32.totalorder %s27, 0
      %p262 = por %p260, %p261
      %p263 = scmp.ne.s32.totalorder %s255, %s257
      %p264 = scmp.eq.s32.totalorder %s32, 1
      %p265 = por %p263, %p264
      %p266 = scmp.ne.s32.totalorder %s257, %s258
      %p267 = scmp.eq.s32.totalorder %s32, 0
      %p268 = por %p266, %p267
      %p269 = scmp.ne.s32.totalorder %s257, %s258
      %p270 = scmp.eq.s32.totalorder %s33, 1
      %p271 = por %p269, %p270
      %p273 = scmp.ne.s32.totalorder %s258, %s272
      %p274 = scmp.eq.s32.totalorder %s33, 0
      %p275 = por %p273, %p274
      %s276 = ssub.s32 %s27, %s34
      %p277 = scmp.eq.s32.totalorder %s276, 0
      %s279 = sadd.s32 %s278, 1
      %s280 = scalar_select %p277, %s278, %s279
      %p283 = pneg %p277
      %p284 = scmp.eq.s32.totalorder %s27, 1
      %p285 = por %p283, %p284
      %p286 = scmp.ne.s32.totalorder %s278, %s281
      %p287 = scmp.eq.s32.totalorder %s27, 0
      %p288 = por %p286, %p287
      %p289 = scmp.ne.s32.totalorder %s278, %s281
      %p290 = scmp.eq.s32.totalorder %s32, 1
      %p291 = por %p289, %p290
      %p292 = scmp.ne.s32.totalorder %s281, %s282
      %p293 = scmp.eq.s32.totalorder %s32, 0
      %p294 = por %p292, %p293
      %p295 = scmp.ne.s32.totalorder %s281, %s282
      %p296 = scmp.eq.s32.totalorder %s33, 1
      %p297 = por %p295, %p296
      %p299 = scmp.ne.s32.totalorder %s282, %s298
      %p300 = scmp.eq.s32.totalorder %s33, 0
      %p301 = por %p299, %p300
      %p302 = scmp.le.s32.totalorder 1, %s27
      %p303 = scmp.lt.s32.totalorder %s27, 3
      %p304 = pnand %p302, %p303
      %p305 = pneg %p304
      // Predicated region
      $region9: #{tpu_custom_call.1} parent=5 // pred_check
        _
      $region10: #{tpu_custom_call.1} parent=5 // pred_check_branch
        %307 = sbr.rel (%p304) target = $region12
      $region11: #{tpu_custom_call.1} parent=5 // pred_region
        %s308 = ssub.s32 %s27, 1
        // Predicated region
        $region13: #{tpu_custom_call.1} parent=11 // pred_check
          %p309 = pneg %p100
        $region14: #{tpu_custom_call.1} parent=11 // pred_check_branch
          %311 = sbr.rel (%p309) target = $region16
        $region15: #{tpu_custom_call.1} parent=11 // pred_region
          _
        $region16: #{tpu_custom_call.1} parent=11 // pred_fallthru
          _
        // Predicated region
        $region17: #{tpu_custom_call.1} parent=11 // pred_check
          %p312 = pneg %p121
        $region18: #{tpu_custom_call.1} parent=11 // pred_check_branch
          %314 = sbr.rel (%p312) target = $region20
        $region19: #{tpu_custom_call.1} parent=11 // pred_region
          _
        $region20: #{tpu_custom_call.1} parent=11 // pred_fallthru
          _
        // Predicated region
        $region21: #{tpu_custom_call.1} parent=11 // pred_check
          %p315 = pneg %p142
        $region22: #{tpu_custom_call.1} parent=11 // pred_check_branch
          %317 = sbr.rel (%p315) target = $region24
        $region23: #{tpu_custom_call.1} parent=11 // pred_region
          _
        $region24: #{tpu_custom_call.1} parent=11 // pred_fallthru
          _
        // Predicated region
        $region25: #{tpu_custom_call.1} parent=11 // pred_check
          %p318 = pneg %p163
        $region26: #{tpu_custom_call.1} parent=11 // pred_check_branch
          %320 = sbr.rel (%p318) target = $region28
        $region27: #{tpu_custom_call.1} parent=11 // pred_region
          _
        $region28: #{tpu_custom_call.1} parent=11 // pred_fallthru
          _
        // Predicated region
        $region29: #{tpu_custom_call.1} parent=11 // pred_check
          %p321 = pneg %p184
        $region30: #{tpu_custom_call.1} parent=11 // pred_check_branch
          %323 = sbr.rel (%p321) target = $region32
        $region31: #{tpu_custom_call.1} parent=11 // pred_region
          %s325 = ssub.s32 1024, 1024
          %326 = vsyncadd [#allocation6], %s325
          %s327 = sshll.u32 [#allocation7], 4
          %s328 = int_to_ptr.vmem [resolvable:$true] %s327
          %333 = dma.hbm_to_vmem [thread:$0]  %s6, 1024, %s328, [#allocation6], 256, 256, 16
        $region32: #{tpu_custom_call.1} parent=11 // pred_fallthru
          _
        // Predicated region
        $region33: #{tpu_custom_call.1} parent=11 // pred_check
          %p334 = pneg %p205
        $region34: #{tpu_custom_call.1} parent=11 // pred_check_branch
          %336 = sbr.rel (%p334) target = $region36
        $region35: #{tpu_custom_call.1} parent=11 // pred_region
          %s338 = ssub.s32 768, 768
          %339 = vsyncadd [#allocation9], %s338
          %s340 = sshll.u32 [#allocation8], 4
          %s341 = int_to_ptr.vmem [resolvable:$true] %s340
          %346 = dma.hbm_to_vmem [thread:$0]  %s7, 768, %s341, [#allocation9], 128, 128, 8
        $region36: #{tpu_custom_call.1} parent=11 // pred_fallthru
          _
        // Predicated region
        $region37: #{tpu_custom_call.1} parent=11 // pred_check
          %p347 = pneg %p226
        $region38: #{tpu_custom_call.1} parent=11 // pred_check_branch
          %349 = sbr.rel (%p347) target = $region40
        $region39: #{tpu_custom_call.1} parent=11 // pred_region
          _
        $region40: #{tpu_custom_call.1} parent=11 // pred_fallthru
          _
        // Predicated region
        $region41: #{tpu_custom_call.1} parent=11 // pred_check
          %p350 = pneg %p247
        $region42: #{tpu_custom_call.1} parent=11 // pred_check_branch
          %352 = sbr.rel (%p350) target = $region44
        $region43: #{tpu_custom_call.1} parent=11 // pred_region
          _
        $region44: #{tpu_custom_call.1} parent=11 // pred_fallthru
          _
        // Predicated region
        $region45: #{tpu_custom_call.1} parent=11 // pred_check
          %p353 = pneg %p268
        $region46: #{tpu_custom_call.1} parent=11 // pred_check_branch
          %355 = sbr.rel (%p353) target = $region48
        $region47: #{tpu_custom_call.1} parent=11 // pred_region
          _
        $region48: #{tpu_custom_call.1} parent=11 // pred_fallthru
          _
      $region12: #{tpu_custom_call.1} parent=5 // pred_fallthru
        _
      %p356 = scmp.lt.s32.totalorder %s27, 2
      // Predicated region
      $region49: #{tpu_custom_call.1} parent=5 // pred_check
        %p357 = pneg %p356
      $region50: #{tpu_custom_call.1} parent=5 // pred_check_branch
        %359 = sbr.rel (%p357) target = $region52
      $region51: #{tpu_custom_call.1} parent=5 // pred_region
        // Predicated region
        $region53: #{tpu_custom_call.1} parent=51 // pred_check
          %p360 = pneg %p47
        $region54: #{tpu_custom_call.1} parent=51 // pred_check_branch
          %362 = sbr.rel (%p360) target = $region56
        $region55: #{tpu_custom_call.1} parent=51 // pred_region
          %s363 = sand.u32 %s37, 1
          %s364 = scalar_lea.sflag [#allocation3], %s363
          %s365 = sand.u32 %s37, 1
          %s366 = smul.addr %s365, 32
          %s367 = scalar_lea.vmem [#allocation2], %s366
          %s369 = ssub.s32 512, 512
          %370 = vsyncadd %s364, %s369
          %s371 = smul.addr %s27, 4
          %s372 = smul.addr %s371, 128
          %s373 = scalar_lea.hbm %s0, %s372
          %s374 = sshll.u32 %s367, 4
          %s375 = int_to_ptr.vmem [resolvable:$true] %s374
          %380 = dma.hbm_to_vmem [thread:$0]  %s373, 512, %s375, %s364, 256, 256, 16
        $region56: #{tpu_custom_call.1} parent=51 // pred_fallthru
          _
        // Predicated region
        $region57: #{tpu_custom_call.1} parent=51 // pred_check
          %p381 = pneg %p73
        $region58: #{tpu_custom_call.1} parent=51 // pred_check_branch
          %383 = sbr.rel (%p381) target = $region60
        $region59: #{tpu_custom_call.1} parent=51 // pred_region
          %s384 = sand.u32 %s27, 1
          %s385 = scalar_lea.sflag [#allocation6], %s384
          %s386 = sand.u32 %s63, 1
          %s387 = smul.addr %s386, 32
          %s388 = scalar_lea.vmem [#allocation5], %s387
          %s390 = ssub.s32 512, 512
          %391 = vsyncadd %s385, %s390
          %s392 = smul.addr %s27, 4
          %s393 = smul.addr %s392, 128
          %s394 = scalar_lea.hbm %s1, %s393
          %s395 = sshll.u32 %s388, 4
          %s396 = int_to_ptr.vmem [resolvable:$true] %s395
          %401 = dma.hbm_to_vmem [thread:$0]  %s394, 512, %s396, %s385, 256, 256, 16
        $region60: #{tpu_custom_call.1} parent=51 // pred_fallthru
          _
      $region52: #{tpu_custom_call.1} parent=5 // pred_fallthru
        _
      %p402 = scmp.le.s32.totalorder 1, %s27
      %p403 = scmp.lt.s32.totalorder %s27, 3
      %p404 = pnand %p402, %p403
      %p405 = pneg %p404
      // Predicated region
      $region61: #{tpu_custom_call.1} parent=5 // pred_check
        _
      $region62: #{tpu_custom_call.1} parent=5 // pred_check_branch
        %407 = sbr.rel (%p404) target = $region64
      $region63: #{tpu_custom_call.1} parent=5 // pred_region
        %s408 = ssub.s32 %s27, 1
        %s409 = sand.u32 %s40, 1
        %s410 = scalar_lea.sflag [#allocation3], %s409
        %s411 = sand.u32 %s40, 1
        %s412 = smul.addr %s411, 32
        %s413 = scalar_lea.vmem [#allocation2], %s412
        // Predicated region
        $region65: #{tpu_custom_call.1} parent=63 // pred_check
          %p414 = pneg %p53
        $region66: #{tpu_custom_call.1} parent=63 // pred_check_branch
          %416 = sbr.rel (%p414) target = $region68
        $region67: #{tpu_custom_call.1} parent=63 // pred_region
          %417 = dma.done %s410, 512
        $region68: #{tpu_custom_call.1} parent=63 // pred_fallthru
          _
        %s418 = sand.u32 %s32, 1
        %s419 = scalar_lea.sflag [#allocation6], %s418
        %s420 = sand.u32 %s66, 1
        %s421 = smul.addr %s420, 32
        %s422 = scalar_lea.vmem [#allocation5], %s421
        // Predicated region
        $region69: #{tpu_custom_call.1} parent=63 // pred_check
          %p423 = pneg %p79
        $region70: #{tpu_custom_call.1} parent=63 // pred_check_branch
          %425 = sbr.rel (%p423) target = $region72
        $region71: #{tpu_custom_call.1} parent=63 // pred_region
          %426 = dma.done %s419, 512
        $region72: #{tpu_custom_call.1} parent=63 // pred_fallthru
          _
        // Predicated region
        $region73: #{tpu_custom_call.1} parent=63 // pred_check
          %p427 = pneg %p184
        $region74: #{tpu_custom_call.1} parent=63 // pred_check_branch
          %429 = sbr.rel (%p427) target = $region76
        $region75: #{tpu_custom_call.1} parent=63 // pred_region
          %430 = dma.done [#allocation6], 1024
        $region76: #{tpu_custom_call.1} parent=63 // pred_fallthru
          _
        // Predicated region
        $region77: #{tpu_custom_call.1} parent=63 // pred_check
          %p431 = pneg %p205
        $region78: #{tpu_custom_call.1} parent=63 // pred_check_branch
          %433 = sbr.rel (%p431) target = $region80
        $region79: #{tpu_custom_call.1} parent=63 // pred_region
          %434 = dma.done [#allocation9], 768
        $region80: #{tpu_custom_call.1} parent=63 // pred_fallthru
          _
        %s435 = sand.u32 %s40, 1
        %s436 = scalar_lea.sflag [#allocation3], %s435
        %s437 = sand.u32 %s40, 1
        %s438 = smul.addr %s437, 32
        %s439 = scalar_lea.vmem [#allocation2], %s438
        %p440 = pneg %p53
        %p441 = pneg %p50
        %s442 = sand.u32 %s32, 1
        %s443 = scalar_lea.sflag [#allocation6], %s442
        %s444 = sand.u32 %s66, 1
        %s445 = smul.addr %s444, 32
        %s446 = scalar_lea.vmem [#allocation5], %s445
        %p447 = pneg %p79
        %p448 = pneg %p76
        %p449 = pneg %p100
        %p450 = pneg %p97
        %p451 = pneg %p121
        %p452 = pneg %p118
        %p453 = pneg %p142
        %p454 = pneg %p139
        %p455 = pneg %p163
        %p456 = pneg %p160
        %p457 = pneg %p184
        %p458 = pneg %p181
        %p459 = pneg %p205
        %p460 = pneg %p202
        %p461 = pneg %p226
        %p462 = pneg %p223
        %p463 = pneg %p247
        %p464 = pneg %p244
        %p465 = pneg %p268
        %p466 = pneg %p265
        %p467 = pneg %p294
        %p468 = pneg %p291
        %s469 = sand.u32 %s281, 1
        %s470 = scalar_lea.sflag [#allocation4], %s469
        %s471 = sand.u32 %s281, 1
        %s472 = smul.addr %s471, 64
        %s473 = scalar_lea.vmem [#allocation10], %s472
        %v474 = vld [vmem:[%s413] sm:$0xff]
        %v475 = vld [vmem:[%s413 + $0x8] sm:$0xff]
        %v476 = vld [vmem:[%s413 + $0x10] sm:$0xff]
        %v477 = vld [vmem:[%s413 + $0x18] sm:$0xff]
        %v478 = vld [vmem:[%s422] sm:$0xff]
        %v479 = vld [vmem:[%s422 + $0x8] sm:$0xff]
        %v480 = vld [vmem:[%s422 + $0x10] sm:$0xff]
        %v481 = vld [vmem:[%s422 + $0x18] sm:$0xff]
        %v482 = vld [vmem:[%s2] sm:$0x3]
        %v483 = vld [vmem:[%s4] sm:$0xff]
        %v484 = vld [vmem:[%s4 + $0x8] sm:$0xff]
        %v485 = vld [vmem:[%s5] sm:$0xff]
        %v486 = vld [vmem:[%s5 + $0x8] sm:$0xff]
        %v487 = vld [vmem:[%s3] sm:$0xff]
        %v488 = vld [vmem:[%s3 + $0x8] sm:$0xff]
        %v489 = vadd.f32 %v474, %v475
        %490 = vadd.xlane.f32.xlu0 %v489
        %v491 = vpop.xlane.xlu0 %490
        %v492 = vadd.f32 %v476, %v477
        %493 = vadd.xlane.f32.xlu0 %v492
        %v494 = vpop.xlane.xlu0 %493
        %v495 = vmul.f32 %v474, %v474
        %v496 = vmul.f32 %v475, %v475
        %v497 = vmul.f32 %v476, %v476
        %v498 = vmul.f32 %v477, %v477
        %v499 = vadd.f32 %v495, %v496
        %500 = vadd.xlane.f32.xlu0 %v499
        %v501 = vpop.xlane.xlu0 %500
        %v502 = vadd.f32 %v497, %v498
        %503 = vadd.xlane.f32.xlu0 %v502
        %v504 = vpop.xlane.xlu0 %503
        %vm505 = vcmask 7168
        %v506 = vsel %vm505, %v491, %v501
        %v507 = vsel %vm505, %v494, %v504
        %vm508 = vcmask 130048
        %v510 = vsel %vm508, %v487, 0
        %v513 = vsel %vm508, %v488, 0
        %515 = vmatprep.subr.mxu0 0.0
        %516 = vmatpush1.msra.mxu0 0.0
        %517 = vmatprep.subr.mxu0 0.0
        %518 = vmatpush1.msra.mxu0 0.0
        %519 = vmatprep.subr.mxu0 0.0
        %520 = vmatpush1.msra.mxu0 0.0
        %521 = vmatprep.subr.mxu0 0.0
        %522 = vmatpush1.msra.mxu0 0.0
        %523 = vmatprep.subr.mxu0 0.0
        %524 = vmatpush1.msra.mxu0 0.0
        %525 = vmatprep.subr.mxu0 0.0
        %526 = vmatpush1.msra.mxu0 0.0
        %527 = vmatprep.subr.mxu0 0.0
        %528 = vmatpush1.msra.mxu0 0.0
        %529 = vmatprep.subr.mxu0 0.0
        %530 = vmatpush1.msra.mxu0 0.0
        %531 = vmatprep.subr.mxu0 0.0
        %532 = vmatpush1.msra.mxu0 0.0
        %533 = vmatprep.subr.mxu0 0.0
        %534 = vmatpush1.msra.mxu0 0.0
        %535 = vmatprep.subr.mxu0 0.0
        %536 = vmatpush1.msra.mxu0 0.0
        %537 = vmatprep.subr.mxu0 0.0
        %538 = vmatpush1.msra.mxu0 0.0
        %539 = vmatprep.subr.mxu0 0.0
        %540 = vmatpush1.msra.mxu0 0.0
        %541 = vmatprep.subr.mxu0 0.0
        %542 = vmatpush1.msra.mxu0 0.0
        %543 = vmatprep.subr.mxu0 0.0
        %544 = vmatpush1.msra.mxu0 %v507
        %545 = vmatprep.subr.mxu0 0.0
        %546 = vmatpush1.msra.mxu0 %v506
        %547 = vmatprep.subr.mxu0 0.0
        %548 = vmatpush2.msra.mxu0 0.0
        %549 = vmatprep.subr.mxu0 0.0
        %550 = vmatpush2.msra.mxu0 0.0
        %551 = vmatprep.subr.mxu0 0.0
        %552 = vmatpush2.msra.mxu0 0.0
        %553 = vmatprep.subr.mxu0 0.0
        %554 = vmatpush2.msra.mxu0 0.0
        %555 = vmatprep.subr.mxu0 0.0
        %556 = vmatpush2.msra.mxu0 0.0
        %557 = vmatprep.subr.mxu0 0.0
        %558 = vmatpush2.msra.mxu0 0.0
        %559 = vmatprep.subr.mxu0 0.0
        %560 = vmatpush2.msra.mxu0 0.0
        %561 = vmatprep.subr.mxu0 0.0
        %562 = vmatpush2.msra.mxu0 0.0
        %563 = vmatprep.subr.mxu0 0.0
        %564 = vmatpush2.msra.mxu0 0.0
        %565 = vmatprep.subr.mxu0 0.0
        %566 = vmatpush2.msra.mxu0 0.0
        %567 = vmatprep.subr.mxu0 0.0
        %568 = vmatpush2.msra.mxu0 0.0
        %569 = vmatprep.subr.mxu0 0.0
        %570 = vmatpush2.msra.mxu0 0.0
        %571 = vmatprep.subr.mxu0 0.0
        %572 = vmatpush2.msra.mxu0 0.0
        %573 = vmatprep.subr.mxu0 0.0
        %574 = vmatpush2.msra.mxu0 0.0
        %575 = vmatprep.subr.mxu0 0.0
        %576 = vmatpush2.msra.mxu0 0.0
        %577 = vmatprep.subr.mxu0 0.0
        %578 = vmatpush2.msra.mxu0 0.0
        %579 = vmatprep.mubr.f32.mxu0 0.0
        %580 = vmatmul.mubr.f32.gmra.mxu0 %v510
        %v581 = vpop.f32.mrf.mxu0
        %v582 = vadd.f32 0.0, %v581
        %v583 = vpop.f32.mrf.mxu0
        %584 = vmatprep.mubr.f32.mxu0 0.0
        %585 = vmatmul.mubr.f32.gmra.mxu0 %v513
        %v586 = vpop.f32.mrf.mxu0
        %v587 = vadd.f32 0.0, %v586
        %v588 = vpop.f32.mrf.mxu0
        %589 = vdwg.mxu0
        %v590 = vmul.f32 %v582, 0.00390625
        %v591 = vmul.f32 %v587, 0.00390625
        %v592 = vmul.f32 %v590, %v590
        %v593 = vmul.f32 %v591, %v591
        %596 = vrot.lane.b32.xlu0 %v592, 1
        %v597 = vpop.permute.xlu0 %596
        %598 = vrot.lane.b32.xlu0 %v593, 1
        %v599 = vpop.permute.xlu0 %598
        %v602 = vsub.f32 %v590, %v597
        %v603 = vsub.f32 %v591, %v599
        %v604 = vadd.f32 %v602, 1e-05
        %v605 = vadd.f32 %v603, 1e-05
        %v606 = vrsqrt.pop %v604
        %v607 = vrsqrt.pop %v605
        %610 = vrot.lane.b32.xlu0 %v606, 127
        %v611 = vpop.permute.xlu0 %610
        %612 = vrot.lane.b32.xlu0 %v607, 127
        %v613 = vpop.permute.xlu0 %612
        %v616 = vmul.f32 %v483, %v611
        %v617 = vmul.f32 %v484, %v613
        %v618 = vmul.f32 %v590, %v616
        %v619 = vmul.f32 %v591, %v617
        %v620 = vsub.f32 %v485, %v618
        %v621 = vsub.f32 %v486, %v619
        %623 = vset.pattern.permute.xlu0 0
        %624 = vperm.xlu0 %623, %v616
        %v625 = vpop.permute.xlu0 %624
        %628 = vset.pattern.permute.xlu0 0
        %629 = vperm.xlu0 %628, %v617
        %v630 = vpop.permute.xlu0 %629
        %v632 = vmul.f32 %v474, %v625
        %v633 = vmul.f32 %v475, %v625
        %v634 = vmul.f32 %v476, %v630
        %v635 = vmul.f32 %v477, %v630
        %637 = vset.pattern.permute.xlu0 0
        %638 = vperm.xlu0 %637, %v620
        %v639 = vpop.permute.xlu0 %638
        %642 = vset.pattern.permute.xlu0 0
        %643 = vperm.xlu0 %642, %v621
        %v644 = vpop.permute.xlu0 %643
        %v646 = vadd.f32 %v632, %v639
        %v647 = vadd.f32 %v633, %v639
        %v648 = vadd.f32 %v634, %v644
        %v649 = vadd.f32 %v635, %v644
        %v650 = vmax.f32 %v646, 0.0
        %v651 = vmax.f32 %v647, 0.0
        %v652 = vmax.f32 %v648, 0.0
        %v653 = vmax.f32 %v649, 0.0
        %v654 = vld [vmem:[#allocation7] sm:$0xff]
        %v655 = vld [vmem:[#allocation7 + $0x8] sm:$0xff]
        %v656 = vld [vmem:[#allocation7 + $0x10] sm:$0xff]
        %v657 = vld [vmem:[#allocation7 + $0x18] sm:$0xff]
        %v658 = vld [vmem:[#allocation7 + $0x20] sm:$0xff]
        %v659 = vld [vmem:[#allocation7 + $0x28] sm:$0xff]
        %v660 = vld [vmem:[#allocation7 + $0x30] sm:$0xff]
        %v661 = vld [vmem:[#allocation7 + $0x38] sm:$0xff]
        %666 = vrot.lane.b32.xlu0 %v650, 17
        %v667 = vpop.permute.xlu0 %666
        %668 = vrot.lane.b32.xlu0 %v651, 17
        %v669 = vpop.permute.xlu0 %668
        %670 = vrot.lane.b32.xlu0 %v652, 17
        %v671 = vpop.permute.xlu0 %670
        %672 = vrot.lane.b32.xlu0 %v653, 17
        %v673 = vpop.permute.xlu0 %672
        %vm674 = vcmask 138240
        %v675 = vsel %vm674, %v667, %v669
        %v676 = vsel %vm674, %v671, %v673
        %v683 = vsel %vm674, 0.0, %v667
        %v684 = vsel %vm674, 0.0, %v671
        %v685 = vsel %vm674, %v669, 0.0
        %v686 = vsel %vm674, %v673, 0.0
        %vm687 = vcmp.ge.s32.totalorder %v482, 1
        %v688 = vsel %vm687, 1, 0
        %v689 = vlaneseq
        %v690 = vshrl.u32 %v689, 7
        %v691 = vsub.s32 0, %v690
        %v692 = vrot.slane %v688, %v691
        %v693 = vlaneseq
        %v694 = vshrl.u32 %v693, 7
        %v695 = vsub.s32 1, %v694
        %v696 = vrot.slane %v688, %v695
        %vm697 = vcmp.eq.s32.totalorder %v692, 1
        %vm698 = vcmp.eq.s32.totalorder %v696, 1
        %v699 = vsel %vm697, %v683, 0.0
        %v700 = vsel %vm698, %v675, 0.0
        %v701 = vsel %vm697, %v684, 0.0
        %v702 = vsel %vm698, %v676, 0.0
        %vm703 = vcmp.lt.s32.totalorder %v482, 15
        %v704 = vsel %vm703, 1, 0
        %v705 = vlaneseq
        %v706 = vshrl.u32 %v705, 7
        %v707 = vsub.s32 0, %v706
        %v708 = vrot.slane %v704, %v707
        %v709 = vlaneseq
        %v710 = vshrl.u32 %v709, 7
        %v711 = vsub.s32 1, %v710
        %v712 = vrot.slane %v704, %v711
        %vm713 = vcmp.eq.s32.totalorder %v708, 1
        %vm714 = vcmp.eq.s32.totalorder %v712, 1
        %719 = vrot.lane.b32.xlu0 %v683, 126
        %v720 = vpop.permute.xlu0 %719
        %721 = vrot.lane.b32.xlu0 %v675, 126
        %v722 = vpop.permute.xlu0 %721
        %723 = vrot.lane.b32.xlu0 %v685, 126
        %v724 = vpop.permute.xlu0 %723
        %725 = vrot.lane.b32.xlu0 %v684, 126
        %v726 = vpop.permute.xlu0 %725
        %727 = vrot.lane.b32.xlu0 %v676, 126
        %v728 = vpop.permute.xlu0 %727
        %729 = vrot.lane.b32.xlu0 %v686, 126
        %v730 = vpop.permute.xlu0 %729
        %vm731 = vcmask 1031168
        %v732 = vsel %vm731, %v720, %v722
        %v733 = vsel %vm731, %v722, %v724
        %v734 = vsel %vm731, %v726, %v728
        %v735 = vsel %vm731, %v728, %v730
        %v740 = vsel %vm713, %v732, 0.0
        %v741 = vsel %vm714, %v733, 0.0
        %v742 = vsel %vm713, %v734, 0.0
        %v743 = vsel %vm714, %v735, 0.0
        %744 = vrot.lane.b32.xlu0 %v683, 112
        %v745 = vpop.permute.xlu0 %744
        %746 = vrot.lane.b32.xlu0 %v675, 112
        %v747 = vpop.permute.xlu0 %746
        %748 = vrot.lane.b32.xlu0 %v685, 112
        %v749 = vpop.permute.xlu0 %748
        %750 = vrot.lane.b32.xlu0 %v684, 112
        %v751 = vpop.permute.xlu0 %750
        %752 = vrot.lane.b32.xlu0 %v676, 112
        %v753 = vpop.permute.xlu0 %752
        %754 = vrot.lane.b32.xlu0 %v686, 112
        %v755 = vpop.permute.xlu0 %754
        %vm756 = vcmask 916480
        %v757 = vsel %vm756, %v745, %v747
        %v758 = vsel %vm756, %v747, %v749
        %v759 = vsel %vm756, %v751, %v753
        %v760 = vsel %vm756, %v753, %v755
        %v765 = vsel %vm697, %v757, 0.0
        %v766 = vsel %vm698, %v758, 0.0
        %v767 = vsel %vm697, %v759, 0.0
        %v768 = vsel %vm698, %v760, 0.0
        %769 = vrot.lane.b32.xlu0 %v683, 110
        %v770 = vpop.permute.xlu0 %769
        %771 = vrot.lane.b32.xlu0 %v675, 110
        %v772 = vpop.permute.xlu0 %771
        %773 = vrot.lane.b32.xlu0 %v685, 110
        %v774 = vpop.permute.xlu0 %773
        %775 = vrot.lane.b32.xlu0 %v684, 110
        %v776 = vpop.permute.xlu0 %775
        %777 = vrot.lane.b32.xlu0 %v676, 110
        %v778 = vpop.permute.xlu0 %777
        %779 = vrot.lane.b32.xlu0 %v686, 110
        %v780 = vpop.permute.xlu0 %779
        %vm781 = vcmask 900096
        %v782 = vsel %vm781, %v770, %v772
        %v783 = vsel %vm781, %v772, %v774
        %v784 = vsel %vm781, %v776, %v778
        %v785 = vsel %vm781, %v778, %v780
        %v790 = vsel %vm713, %v782, 0.0
        %v791 = vsel %vm714, %v783, 0.0
        %v792 = vsel %vm713, %v784, 0.0
        %v793 = vsel %vm714, %v785, 0.0
        %794 = vrot.lane.b32.xlu0 %v683, 96
        %v795 = vpop.permute.xlu0 %794
        %796 = vrot.lane.b32.xlu0 %v675, 96
        %v797 = vpop.permute.xlu0 %796
        %798 = vrot.lane.b32.xlu0 %v685, 96
        %v799 = vpop.permute.xlu0 %798
        %800 = vrot.lane.b32.xlu0 %v684, 96
        %v801 = vpop.permute.xlu0 %800
        %802 = vrot.lane.b32.xlu0 %v676, 96
        %v803 = vpop.permute.xlu0 %802
        %804 = vrot.lane.b32.xlu0 %v686, 96
        %v805 = vpop.permute.xlu0 %804
        %vm806 = vcmask 785408
        %v807 = vsel %vm806, %v795, %v797
        %v808 = vsel %vm806, %v797, %v799
        %v809 = vsel %vm806, %v801, %v803
        %v810 = vsel %vm806, %v803, %v805
        %v815 = vsel %vm697, %v807, 0.0
        %v816 = vsel %vm698, %v808, 0.0
        %v817 = vsel %vm697, %v809, 0.0
        %v818 = vsel %vm698, %v810, 0.0
        %819 = vrot.lane.b32.xlu0 %v683, 94
        %v820 = vpop.permute.xlu0 %819
        %821 = vrot.lane.b32.xlu0 %v675, 94
        %v822 = vpop.permute.xlu0 %821
        %823 = vrot.lane.b32.xlu0 %v685, 94
        %v824 = vpop.permute.xlu0 %823
        %825 = vrot.lane.b32.xlu0 %v684, 94
        %v826 = vpop.permute.xlu0 %825
        %827 = vrot.lane.b32.xlu0 %v676, 94
        %v828 = vpop.permute.xlu0 %827
        %829 = vrot.lane.b32.xlu0 %v686, 94
        %v830 = vpop.permute.xlu0 %829
        %vm831 = vcmask 769024
        %v832 = vsel %vm831, %v820, %v822
        %v833 = vsel %vm831, %v822, %v824
        %v834 = vsel %vm831, %v826, %v828
        %v835 = vsel %vm831, %v828, %v830
        %v840 = vsel %vm713, %v832, 0.0
        %v841 = vsel %vm714, %v833, 0.0
        %v842 = vsel %vm713, %v834, 0.0
        %v843 = vsel %vm714, %v835, 0.0
        %844 = vrot.lane.b32.xlu0 %v683, 127
        %v845 = vpop.permute.xlu0 %844
        %846 = vrot.lane.b32.xlu0 %v675, 127
        %v847 = vpop.permute.xlu0 %846
        %848 = vrot.lane.b32.xlu0 %v685, 127
        %v849 = vpop.permute.xlu0 %848
        %850 = vrot.lane.b32.xlu0 %v684, 127
        %v851 = vpop.permute.xlu0 %850
        %852 = vrot.lane.b32.xlu0 %v676, 127
        %v853 = vpop.permute.xlu0 %852
        %854 = vrot.lane.b32.xlu0 %v686, 127
        %v855 = vpop.permute.xlu0 %854
        %vm856 = vcmask 1039360
        %v857 = vsel %vm856, %v845, %v847
        %v858 = vsel %vm856, %v847, %v849
        %v859 = vsel %vm856, %v851, %v853
        %v860 = vsel %vm856, %v853, %v855
        %865 = vrot.lane.b32.xlu0 %v683, 111
        %v866 = vpop.permute.xlu0 %865
        %867 = vrot.lane.b32.xlu0 %v675, 111
        %v868 = vpop.permute.xlu0 %867
        %869 = vrot.lane.b32.xlu0 %v685, 111
        %v870 = vpop.permute.xlu0 %869
        %871 = vrot.lane.b32.xlu0 %v684, 111
        %v872 = vpop.permute.xlu0 %871
        %873 = vrot.lane.b32.xlu0 %v676, 111
        %v874 = vpop.permute.xlu0 %873
        %875 = vrot.lane.b32.xlu0 %v686, 111
        %v876 = vpop.permute.xlu0 %875
        %vm877 = vcmask 908288
        %v878 = vsel %vm877, %v866, %v868
        %v879 = vsel %vm877, %v868, %v870
        %v880 = vsel %vm877, %v872, %v874
        %v881 = vsel %vm877, %v874, %v876
        %886 = vrot.lane.b32.xlu0 %v683, 95
        %v887 = vpop.permute.xlu0 %886
        %888 = vrot.lane.b32.xlu0 %v675, 95
        %v889 = vpop.permute.xlu0 %888
        %890 = vrot.lane.b32.xlu0 %v685, 95
        %v891 = vpop.permute.xlu0 %890
        %892 = vrot.lane.b32.xlu0 %v684, 95
        %v893 = vpop.permute.xlu0 %892
        %894 = vrot.lane.b32.xlu0 %v676, 95
        %v895 = vpop.permute.xlu0 %894
        %896 = vrot.lane.b32.xlu0 %v686, 95
        %v897 = vpop.permute.xlu0 %896
        %vm898 = vcmask 777216
        %v899 = vsel %vm898, %v887, %v889
        %v900 = vsel %vm898, %v889, %v891
        %v901 = vsel %vm898, %v893, %v895
        %v902 = vsel %vm898, %v895, %v897
        %v908 = vsel %vm508, %v655, 0
        %v911 = vsel %vm508, %v657, 0
        %v914 = vsel %vm508, %v659, 0
        %v917 = vsel %vm508, %v661, 0
        %919 = vmatprep.subr.mxu0 %v902
        %920 = vmatpush1.msra.mxu0 %v901
        %921 = vmatprep.subr.mxu0 %v900
        %922 = vmatpush1.msra.mxu0 %v899
        %923 = vmatprep.subr.mxu0 %v818
        %924 = vmatpush1.msra.mxu0 %v817
        %925 = vmatprep.subr.mxu0 %v816
        %926 = vmatpush1.msra.mxu0 %v815
        %927 = vmatprep.subr.mxu0 %v793
        %928 = vmatpush1.msra.mxu0 %v792
        %929 = vmatprep.subr.mxu0 %v791
        %930 = vmatpush1.msra.mxu0 %v790
        %931 = vmatprep.subr.mxu0 %v881
        %932 = vmatpush1.msra.mxu0 %v880
        %933 = vmatprep.subr.mxu0 %v879
        %934 = vmatpush1.msra.mxu0 %v878
        %935 = vmatprep.subr.mxu0 %v768
        %936 = vmatpush1.msra.mxu0 %v767
        %937 = vmatprep.subr.mxu0 %v766
        %938 = vmatpush1.msra.mxu0 %v765
        %939 = vmatprep.subr.mxu0 %v743
        %940 = vmatpush1.msra.mxu0 %v742
        %941 = vmatprep.subr.mxu0 %v741
        %942 = vmatpush1.msra.mxu0 %v740
        %943 = vmatprep.subr.mxu0 %v860
        %944 = vmatpush1.msra.mxu0 %v859
        %945 = vmatprep.subr.mxu0 %v858
        %946 = vmatpush1.msra.mxu0 %v857
        %947 = vmatprep.subr.mxu0 %v702
        %948 = vmatpush1.msra.mxu0 %v701
        %949 = vmatprep.subr.mxu0 %v700
        %950 = vmatpush1.msra.mxu0 %v699
        %951 = vmatprep.subr.mxu0 0.0
        %952 = vmatpush2.msra.mxu0 0.0
        %953 = vmatprep.subr.mxu0 0.0
        %954 = vmatpush2.msra.mxu0 0.0
        %955 = vmatprep.subr.mxu0 0.0
        %956 = vmatpush2.msra.mxu0 0.0
        %957 = vmatprep.subr.mxu0 0.0
        %958 = vmatpush2.msra.mxu0 0.0
        %959 = vmatprep.subr.mxu0 0.0
        %960 = vmatpush2.msra.mxu0 0.0
        %961 = vmatprep.subr.mxu0 0.0
        %962 = vmatpush2.msra.mxu0 0.0
        %963 = vmatprep.subr.mxu0 0.0
        %964 = vmatpush2.msra.mxu0 0.0
        %965 = vmatprep.subr.mxu0 0.0
        %966 = vmatpush2.msra.mxu0 0.0
        %967 = vmatprep.subr.mxu0 0.0
        %968 = vmatpush2.msra.mxu0 0.0
        %969 = vmatprep.subr.mxu0 0.0
        %970 = vmatpush2.msra.mxu0 0.0
        %971 = vmatprep.subr.mxu0 0.0
        %972 = vmatpush2.msra.mxu0 0.0
        %973 = vmatprep.subr.mxu0 0.0
        %974 = vmatpush2.msra.mxu0 0.0
        %975 = vmatprep.subr.mxu0 0.0
        %976 = vmatpush2.msra.mxu0 0.0
        %977 = vmatprep.subr.mxu0 0.0
        %978 = vmatpush2.msra.mxu0 0.0
        %979 = vmatprep.subr.mxu0 %v843
        %980 = vmatpush2.msra.mxu0 %v842
        %981 = vmatprep.subr.mxu0 %v841
        %982 = vmatpush2.msra.mxu0 %v840
        %983 = vmatprep.mubr.f32.mxu0 %v908
        %984 = vmatmul.mubr.f32.gmra.mxu0 %v654
        %v985 = vpop.f32.mrf.mxu0
        %v986 = vadd.f32 0.0, %v985
        %v987 = vpop.f32.mrf.mxu0
        %v988 = vadd.f32 0.0, %v987
        %989 = vmatprep.mubr.f32.mxu0 %v911
        %990 = vmatmul.mubr.f32.gmra.mxu0 %v656
        %v991 = vpop.f32.mrf.mxu0
        %v992 = vadd.f32 0.0, %v991
        %v993 = vpop.f32.mrf.mxu0
        %v994 = vadd.f32 0.0, %v993
        %995 = vmatprep.mubr.f32.mxu0 %v914
        %996 = vmatmul.mubr.f32.gmra.mxu0 %v658
        %v997 = vpop.f32.mrf.mxu0
        %v998 = vadd.f32 0.0, %v997
        %v999 = vpop.f32.mrf.mxu0
        %v1000 = vadd.f32 0.0, %v999
        %1001 = vmatprep.mubr.f32.mxu0 %v917
        %1002 = vmatmul.mubr.f32.gmra.mxu0 %v660
        %v1003 = vpop.f32.mrf.mxu0
        %v1004 = vadd.f32 0.0, %v1003
        %v1005 = vpop.f32.mrf.mxu0
        %v1006 = vadd.f32 0.0, %v1005
        %1007 = vdwg.mxu0
        %v1008 = vadd.f32 %v986, %v474
        %v1009 = vadd.f32 %v988, %v475
        %v1010 = vadd.f32 %v992, %v476
        %v1011 = vadd.f32 %v994, %v477
        %v1012 = vld [vmem:[%s8] sm:$0xff]
        %v1013 = vld [vmem:[%s8 + $0x8] sm:$0xff]
        %v1014 = vld [vmem:[%s8 + $0x10] sm:$0xff]
        %v1015 = vld [vmem:[%s8 + $0x18] sm:$0xff]
        %v1016 = vld [vmem:[%s8 + $0x20] sm:$0xff]
        %v1017 = vld [vmem:[%s8 + $0x28] sm:$0xff]
        %v1018 = vld [vmem:[%s9] sm:$0xff]
        %v1019 = vld [vmem:[%s9 + $0x8] sm:$0xff]
        %v1020 = vld [vmem:[%s9 + $0x10] sm:$0xff]
        %v1021 = vld [vmem:[%s9 + $0x18] sm:$0xff]
        %v1022 = vld [vmem:[%s9 + $0x20] sm:$0xff]
        %v1023 = vld [vmem:[%s9 + $0x28] sm:$0xff]
        %v1024 = vld [vmem:[#allocation8] sm:$0xff]
        %v1025 = vld [vmem:[#allocation8 + $0x8] sm:$0xff]
        %v1026 = vld [vmem:[#allocation8 + $0x10] sm:$0xff]
        %v1027 = vld [vmem:[#allocation8 + $0x18] sm:$0xff]
        %v1028 = vld [vmem:[#allocation8 + $0x20] sm:$0xff]
        %v1029 = vld [vmem:[#allocation8 + $0x28] sm:$0xff]
        %v1030 = vadd.f32 %v1008, %v1009
        %1031 = vadd.xlane.f32.xlu0 %v1030
        %v1032 = vpop.xlane.xlu0 %1031
        %v1033 = vadd.f32 %v1010, %v1011
        %1034 = vadd.xlane.f32.xlu0 %v1033
        %v1035 = vpop.xlane.xlu0 %1034
        %v1036 = vadd.f32 %v998, %v1000
        %1037 = vadd.xlane.f32.xlu0 %v1036
        %v1038 = vpop.xlane.xlu0 %1037
        %v1039 = vadd.f32 %v1004, %v1006
        %1040 = vadd.xlane.f32.xlu0 %v1039
        %v1041 = vpop.xlane.xlu0 %1040
        %v1042 = vadd.f32 %v478, %v479
        %1043 = vadd.xlane.f32.xlu0 %v1042
        %v1044 = vpop.xlane.xlu0 %1043
        %v1045 = vadd.f32 %v480, %v481
        %1046 = vadd.xlane.f32.xlu0 %v1045
        %v1047 = vpop.xlane.xlu0 %1046
        %v1048 = vmul.f32 %v1008, %v1008
        %v1049 = vmul.f32 %v1009, %v1009
        %v1050 = vmul.f32 %v1010, %v1010
        %v1051 = vmul.f32 %v1011, %v1011
        %v1052 = vmul.f32 %v998, %v998
        %v1053 = vmul.f32 %v1000, %v1000
        %v1054 = vmul.f32 %v1004, %v1004
        %v1055 = vmul.f32 %v1006, %v1006
        %v1056 = vmul.f32 %v478, %v478
        %v1057 = vmul.f32 %v479, %v479
        %v1058 = vmul.f32 %v480, %v480
        %v1059 = vmul.f32 %v481, %v481
        %v1060 = vadd.f32 %v1048, %v1049
        %1061 = vadd.xlane.f32.xlu0 %v1060
        %v1062 = vpop.xlane.xlu0 %1061
        %v1063 = vadd.f32 %v1050, %v1051
        %1064 = vadd.xlane.f32.xlu0 %v1063
        %v1065 = vpop.xlane.xlu0 %1064
        %v1066 = vadd.f32 %v1052, %v1053
        %1067 = vadd.xlane.f32.xlu0 %v1066
        %v1068 = vpop.xlane.xlu0 %1067
        %v1069 = vadd.f32 %v1054, %v1055
        %1070 = vadd.xlane.f32.xlu0 %v1069
        %v1071 = vpop.xlane.xlu0 %1070
        %v1072 = vadd.f32 %v1056, %v1057
        %1073 = vadd.xlane.f32.xlu0 %v1072
        %v1074 = vpop.xlane.xlu0 %1073
        %v1075 = vadd.f32 %v1058, %v1059
        %1076 = vadd.xlane.f32.xlu0 %v1075
        %v1077 = vpop.xlane.xlu0 %1076
        %v1078 = vsel %vm505, %v1032, %v1062
        %v1079 = vsel %vm505, %v1035, %v1065
        %v1080 = vsel %vm505, %v1038, %v1068
        %v1081 = vsel %vm505, %v1041, %v1071
        %v1082 = vsel %vm505, %v1044, %v1074
        %v1083 = vsel %vm505, %v1047, %v1077
        %vm1084 = vcmask 392192
        %v1086 = vsel %vm1084, %v1024, 0
        %v1089 = vsel %vm1084, %v1025, 0
        %v1092 = vsel %vm1084, %v1026, 0
        %v1095 = vsel %vm1084, %v1027, 0
        %v1098 = vsel %vm1084, %v1028, 0
        %v1101 = vsel %vm1084, %v1029, 0
        %1103 = vmatprep.subr.mxu0 0.0
        %1104 = vmatpush1.msra.mxu0 0.0
        %1105 = vmatprep.subr.mxu0 0.0
        %1106 = vmatpush1.msra.mxu0 0.0
        %1107 = vmatprep.subr.mxu0 0.0
        %1108 = vmatpush1.msra.mxu0 0.0
        %1109 = vmatprep.subr.mxu0 0.0
        %1110 = vmatpush1.msra.mxu0 0.0
        %1111 = vmatprep.subr.mxu0 0.0
        %1112 = vmatpush1.msra.mxu0 0.0
        %1113 = vmatprep.subr.mxu0 0.0
        %1114 = vmatpush1.msra.mxu0 0.0
        %1115 = vmatprep.subr.mxu0 0.0
        %1116 = vmatpush1.msra.mxu0 0.0
        %1117 = vmatprep.subr.mxu0 0.0
        %1118 = vmatpush1.msra.mxu0 0.0
        %1119 = vmatprep.subr.mxu0 0.0
        %1120 = vmatpush1.msra.mxu0 0.0
        %1121 = vmatprep.subr.mxu0 0.0
        %1122 = vmatpush1.msra.mxu0 0.0
        %1123 = vmatprep.subr.mxu0 0.0
        %1124 = vmatpush1.msra.mxu0 %v1083
        %1125 = vmatprep.subr.mxu0 0.0
        %1126 = vmatpush1.msra.mxu0 %v1082
        %1127 = vmatprep.subr.mxu0 0.0
        %1128 = vmatpush1.msra.mxu0 %v1081
        %1129 = vmatprep.subr.mxu0 0.0
        %1130 = vmatpush1.msra.mxu0 %v1080
        %1131 = vmatprep.subr.mxu0 0.0
        %1132 = vmatpush1.msra.mxu0 %v1079
        %1133 = vmatprep.subr.mxu0 0.0
        %1134 = vmatpush1.msra.mxu0 %v1078
        %1135 = vmatprep.subr.mxu0 0.0
        %1136 = vmatpush2.msra.mxu0 0.0
        %1137 = vmatprep.subr.mxu0 0.0
        %1138 = vmatpush2.msra.mxu0 0.0
        %1139 = vmatprep.subr.mxu0 0.0
        %1140 = vmatpush2.msra.mxu0 0.0
        %1141 = vmatprep.subr.mxu0 0.0
        %1142 = vmatpush2.msra.mxu0 0.0
        %1143 = vmatprep.subr.mxu0 0.0
        %1144 = vmatpush2.msra.mxu0 0.0
        %1145 = vmatprep.subr.mxu0 0.0
        %1146 = vmatpush2.msra.mxu0 0.0
        %1147 = vmatprep.subr.mxu0 0.0
        %1148 = vmatpush2.msra.mxu0 0.0
        %1149 = vmatprep.subr.mxu0 0.0
        %1150 = vmatpush2.msra.mxu0 0.0
        %1151 = vmatprep.subr.mxu0 0.0
        %1152 = vmatpush2.msra.mxu0 0.0
        %1153 = vmatprep.subr.mxu0 0.0
        %1154 = vmatpush2.msra.mxu0 0.0
        %1155 = vmatprep.subr.mxu0 0.0
        %1156 = vmatpush2.msra.mxu0 0.0
        %1157 = vmatprep.subr.mxu0 0.0
        %1158 = vmatpush2.msra.mxu0 0.0
        %1159 = vmatprep.subr.mxu0 0.0
        %1160 = vmatpush2.msra.mxu0 0.0
        %1161 = vmatprep.subr.mxu0 0.0
        %1162 = vmatpush2.msra.mxu0 0.0
        %1163 = vmatprep.subr.mxu0 0.0
        %1164 = vmatpush2.msra.mxu0 0.0
        %1165 = vmatprep.subr.mxu0 0.0
        %1166 = vmatpush2.msra.mxu0 0.0
        %1167 = vmatprep.mubr.f32.mxu0 0.0
        %1168 = vmatmul.mubr.f32.gmra.mxu0 %v1086
        %v1169 = vpop.f32.mrf.mxu0
        %v1170 = vadd.f32 0.0, %v1169
        %v1171 = vpop.f32.mrf.mxu0
        %1172 = vmatprep.mubr.f32.mxu0 0.0
        %1173 = vmatmul.mubr.f32.gmra.mxu0 %v1089
        %v1174 = vpop.f32.mrf.mxu0
        %v1175 = vadd.f32 0.0, %v1174
        %v1176 = vpop.f32.mrf.mxu0
        %1177 = vmatprep.mubr.f32.mxu0 0.0
        %1178 = vmatmul.mubr.f32.gmra.mxu0 %v1092
        %v1179 = vpop.f32.mrf.mxu0
        %v1180 = vadd.f32 0.0, %v1179
        %v1181 = vpop.f32.mrf.mxu0
        %1182 = vmatprep.mubr.f32.mxu0 0.0
        %1183 = vmatmul.mubr.f32.gmra.mxu0 %v1095
        %v1184 = vpop.f32.mrf.mxu0
        %v1185 = vadd.f32 0.0, %v1184
        %v1186 = vpop.f32.mrf.mxu0
        %1187 = vmatprep.mubr.f32.mxu0 0.0
        %1188 = vmatmul.mubr.f32.gmra.mxu0 %v1098
        %v1189 = vpop.f32.mrf.mxu0
        %v1190 = vadd.f32 0.0, %v1189
        %v1191 = vpop.f32.mrf.mxu0
        %1192 = vmatprep.mubr.f32.mxu0 0.0
        %1193 = vmatmul.mubr.f32.gmra.mxu0 %v1101
        %v1194 = vpop.f32.mrf.mxu0
        %v1195 = vadd.f32 0.0, %v1194
        %v1196 = vpop.f32.mrf.mxu0
        %1197 = vdwg.mxu0
        %v1198 = vmul.f32 %v1170, 0.0013020834
        %v1199 = vmul.f32 %v1175, 0.0013020834
        %v1200 = vmul.f32 %v1180, 0.0013020834
        %v1201 = vmul.f32 %v1185, 0.0013020834
        %v1202 = vmul.f32 %v1190, 0.0013020834
        %v1203 = vmul.f32 %v1195, 0.0013020834
        %v1204 = vmul.f32 %v1198, %v1198
        %v1205 = vmul.f32 %v1199, %v1199
        %v1206 = vmul.f32 %v1200, %v1200
        %v1207 = vmul.f32 %v1201, %v1201
        %v1208 = vmul.f32 %v1202, %v1202
        %v1209 = vmul.f32 %v1203, %v1203
        %1216 = vrot.lane.b32.xlu0 %v1204, 1
        %v1217 = vpop.permute.xlu0 %1216
        %1218 = vrot.lane.b32.xlu0 %v1205, 1
        %v1219 = vpop.permute.xlu0 %1218
        %1220 = vrot.lane.b32.xlu0 %v1206, 1
        %v1221 = vpop.permute.xlu0 %1220
        %1222 = vrot.lane.b32.xlu0 %v1207, 1
        %v1223 = vpop.permute.xlu0 %1222
        %1224 = vrot.lane.b32.xlu0 %v1208, 1
        %v1225 = vpop.permute.xlu0 %1224
        %1226 = vrot.lane.b32.xlu0 %v1209, 1
        %v1227 = vpop.permute.xlu0 %1226
        %v1234 = vsub.f32 %v1198, %v1217
        %v1235 = vsub.f32 %v1199, %v1219
        %v1236 = vsub.f32 %v1200, %v1221
        %v1237 = vsub.f32 %v1201, %v1223
        %v1238 = vsub.f32 %v1202, %v1225
        %v1239 = vsub.f32 %v1203, %v1227
        %v1240 = vadd.f32 %v1234, 1e-05
        %v1241 = vadd.f32 %v1235, 1e-05
        %v1242 = vadd.f32 %v1236, 1e-05
        %v1243 = vadd.f32 %v1237, 1e-05
        %v1244 = vadd.f32 %v1238, 1e-05
        %v1245 = vadd.f32 %v1239, 1e-05
        %v1246 = vrsqrt.pop %v1240
        %v1247 = vrsqrt.pop %v1241
        %v1248 = vrsqrt.pop %v1242
        %v1249 = vrsqrt.pop %v1243
        %v1250 = vrsqrt.pop %v1244
        %v1251 = vrsqrt.pop %v1245
        %1258 = vrot.lane.b32.xlu0 %v1246, 127
        %v1259 = vpop.permute.xlu0 %1258
        %1260 = vrot.lane.b32.xlu0 %v1247, 127
        %v1261 = vpop.permute.xlu0 %1260
        %1262 = vrot.lane.b32.xlu0 %v1248, 127
        %v1263 = vpop.permute.xlu0 %1262
        %1264 = vrot.lane.b32.xlu0 %v1249, 127
        %v1265 = vpop.permute.xlu0 %1264
        %1266 = vrot.lane.b32.xlu0 %v1250, 127
        %v1267 = vpop.permute.xlu0 %1266
        %1268 = vrot.lane.b32.xlu0 %v1251, 127
        %v1269 = vpop.permute.xlu0 %1268
        %v1276 = vmul.f32 %v1012, %v1259
        %v1277 = vmul.f32 %v1013, %v1261
        %v1278 = vmul.f32 %v1014, %v1263
        %v1279 = vmul.f32 %v1015, %v1265
        %v1280 = vmul.f32 %v1016, %v1267
        %v1281 = vmul.f32 %v1017, %v1269
        %v1282 = vmul.f32 %v1198, %v1276
        %v1283 = vmul.f32 %v1199, %v1277
        %v1284 = vmul.f32 %v1200, %v1278
        %v1285 = vmul.f32 %v1201, %v1279
        %v1286 = vmul.f32 %v1202, %v1280
        %v1287 = vmul.f32 %v1203, %v1281
        %v1288 = vsub.f32 %v1018, %v1282
        %v1289 = vsub.f32 %v1019, %v1283
        %v1290 = vsub.f32 %v1020, %v1284
        %v1291 = vsub.f32 %v1021, %v1285
        %v1292 = vsub.f32 %v1022, %v1286
        %v1293 = vsub.f32 %v1023, %v1287
        %1295 = vset.pattern.permute.xlu0 0
        %1296 = vperm.xlu0 %1295, %v1276
        %v1297 = vpop.permute.xlu0 %1296
        %1300 = vset.pattern.permute.xlu0 0
        %1301 = vperm.xlu0 %1300, %v1277
        %v1302 = vpop.permute.xlu0 %1301
        %1305 = vset.pattern.permute.xlu0 0
        %1306 = vperm.xlu0 %1305, %v1278
        %v1307 = vpop.permute.xlu0 %1306
        %1310 = vset.pattern.permute.xlu0 0
        %1311 = vperm.xlu0 %1310, %v1279
        %v1312 = vpop.permute.xlu0 %1311
        %1315 = vset.pattern.permute.xlu0 0
        %1316 = vperm.xlu0 %1315, %v1280
        %v1317 = vpop.permute.xlu0 %1316
        %1320 = vset.pattern.permute.xlu0 0
        %1321 = vperm.xlu0 %1320, %v1281
        %v1322 = vpop.permute.xlu0 %1321
        %v1324 = vmul.f32 %v1008, %v1297
        %v1325 = vmul.f32 %v1009, %v1297
        %v1326 = vmul.f32 %v1010, %v1302
        %v1327 = vmul.f32 %v1011, %v1302
        %v1328 = vmul.f32 %v998, %v1307
        %v1329 = vmul.f32 %v1000, %v1307
        %v1330 = vmul.f32 %v1004, %v1312
        %v1331 = vmul.f32 %v1006, %v1312
        %v1332 = vmul.f32 %v478, %v1317
        %v1333 = vmul.f32 %v479, %v1317
        %v1334 = vmul.f32 %v480, %v1322
        %v1335 = vmul.f32 %v481, %v1322
        %1337 = vset.pattern.permute.xlu0 0
        %1338 = vperm.xlu0 %1337, %v1288
        %v1339 = vpop.permute.xlu0 %1338
        %1342 = vset.pattern.permute.xlu0 0
        %1343 = vperm.xlu0 %1342, %v1289
        %v1344 = vpop.permute.xlu0 %1343
        %1347 = vset.pattern.permute.xlu0 0
        %1348 = vperm.xlu0 %1347, %v1290
        %v1349 = vpop.permute.xlu0 %1348
        %1352 = vset.pattern.permute.xlu0 0
        %1353 = vperm.xlu0 %1352, %v1291
        %v1354 = vpop.permute.xlu0 %1353
        %1357 = vset.pattern.permute.xlu0 0
        %1358 = vperm.xlu0 %1357, %v1292
        %v1359 = vpop.permute.xlu0 %1358
        %1362 = vset.pattern.permute.xlu0 0
        %1363 = vperm.xlu0 %1362, %v1293
        %v1364 = vpop.permute.xlu0 %1363
        %v1366 = vadd.f32 %v1324, %v1339
        %v1367 = vadd.f32 %v1325, %v1339
        %v1368 = vadd.f32 %v1326, %v1344
        %v1369 = vadd.f32 %v1327, %v1344
        %v1370 = vadd.f32 %v1328, %v1349
        %v1371 = vadd.f32 %v1329, %v1349
        %v1372 = vadd.f32 %v1330, %v1354
        %v1373 = vadd.f32 %v1331, %v1354
        %v1374 = vadd.f32 %v1332, %v1359
        %v1375 = vadd.f32 %v1333, %v1359
        %v1376 = vadd.f32 %v1334, %v1364
        %v1377 = vadd.f32 %v1335, %v1364
        %v1378 = vmax.f32 %v1366, 0.0
        %v1379 = vmax.f32 %v1367, 0.0
        %v1380 = vmax.f32 %v1368, 0.0
        %v1381 = vmax.f32 %v1369, 0.0
        %v1382 = vmax.f32 %v1370, 0.0
        %v1383 = vmax.f32 %v1371, 0.0
        %v1384 = vmax.f32 %v1372, 0.0
        %v1385 = vmax.f32 %v1373, 0.0
        %v1386 = vmax.f32 %v1374, 0.0
        %v1387 = vmax.f32 %v1375, 0.0
        %v1388 = vmax.f32 %v1376, 0.0
        %v1389 = vmax.f32 %v1377, 0.0
        %v1390 = vld [vmem:[%s10] sm:$0xff]
        %v1391 = vld [vmem:[%s10 + $0x8] sm:$0xff]
        %v1392 = vld [vmem:[%s10 + $0x10] sm:$0xff]
        %v1393 = vld [vmem:[%s10 + $0x18] sm:$0xff]
        %v1394 = vld [vmem:[%s10 + $0x20] sm:$0xff]
        %v1395 = vld [vmem:[%s10 + $0x28] sm:$0xff]
        %v1396 = vld [vmem:[%s10 + $0x30] sm:$0xff]
        %v1397 = vld [vmem:[%s10 + $0x38] sm:$0xff]
        %v1398 = vld [vmem:[%s10 + $0x40] sm:$0xff]
        %v1399 = vld [vmem:[%s10 + $0x48] sm:$0xff]
        %v1400 = vld [vmem:[%s10 + $0x50] sm:$0xff]
        %v1401 = vld [vmem:[%s10 + $0x58] sm:$0xff]
        %v1402 = vld [vmem:[%s10 + $0x60] sm:$0xff]
        %v1403 = vld [vmem:[%s10 + $0x68] sm:$0xff]
        %v1404 = vld [vmem:[%s10 + $0x70] sm:$0xff]
        %v1405 = vld [vmem:[%s10 + $0x78] sm:$0xff]
        %1418 = vrot.lane.b32.xlu0 %v1378, 17
        %v1419 = vpop.permute.xlu0 %1418
        %1420 = vrot.lane.b32.xlu0 %v1379, 17
        %v1421 = vpop.permute.xlu0 %1420
        %1422 = vrot.lane.b32.xlu0 %v1380, 17
        %v1423 = vpop.permute.xlu0 %1422
        %1424 = vrot.lane.b32.xlu0 %v1381, 17
        %v1425 = vpop.permute.xlu0 %1424
        %1426 = vrot.lane.b32.xlu0 %v1382, 17
        %v1427 = vpop.permute.xlu0 %1426
        %1428 = vrot.lane.b32.xlu0 %v1383, 17
        %v1429 = vpop.permute.xlu0 %1428
        %1430 = vrot.lane.b32.xlu0 %v1384, 17
        %v1431 = vpop.permute.xlu0 %1430
        %1432 = vrot.lane.b32.xlu0 %v1385, 17
        %v1433 = vpop.permute.xlu0 %1432
        %1434 = vrot.lane.b32.xlu0 %v1386, 17
        %v1435 = vpop.permute.xlu0 %1434
        %1436 = vrot.lane.b32.xlu0 %v1387, 17
        %v1437 = vpop.permute.xlu0 %1436
        %1438 = vrot.lane.b32.xlu0 %v1388, 17
        %v1439 = vpop.permute.xlu0 %1438
        %1440 = vrot.lane.b32.xlu0 %v1389, 17
        %v1441 = vpop.permute.xlu0 %1440
        %v1442 = vsel %vm674, %v1419, %v1421
        %v1443 = vsel %vm674, %v1423, %v1425
        %v1444 = vsel %vm674, %v1427, %v1429
        %v1445 = vsel %vm674, %v1431, %v1433
        %v1446 = vsel %vm674, %v1435, %v1437
        %v1447 = vsel %vm674, %v1439, %v1441
        %v1466 = vsel %vm674, 0.0, %v1419
        %v1467 = vsel %vm674, 0.0, %v1423
        %v1468 = vsel %vm674, 0.0, %v1427
        %v1469 = vsel %vm674, 0.0, %v1431
        %v1470 = vsel %vm674, 0.0, %v1435
        %v1471 = vsel %vm674, 0.0, %v1439
        %v1472 = vsel %vm674, %v1421, 0.0
        %v1473 = vsel %vm674, %v1425, 0.0
        %v1474 = vsel %vm674, %v1429, 0.0
        %v1475 = vsel %vm674, %v1433, 0.0
        %v1476 = vsel %vm674, %v1437, 0.0
        %v1477 = vsel %vm674, %v1441, 0.0
        %v1478 = vsel %vm697, %v1466, 0.0
        %v1479 = vsel %vm698, %v1442, 0.0
        %v1480 = vsel %vm697, %v1467, 0.0
        %v1481 = vsel %vm698, %v1443, 0.0
        %v1482 = vsel %vm697, %v1468, 0.0
        %v1483 = vsel %vm698, %v1444, 0.0
        %v1484 = vsel %vm697, %v1469, 0.0
        %v1485 = vsel %vm698, %v1445, 0.0
        %v1486 = vsel %vm697, %v1470, 0.0
        %v1487 = vsel %vm698, %v1446, 0.0
        %v1488 = vsel %vm697, %v1471, 0.0
        %v1489 = vsel %vm698, %v1447, 0.0
        %1502 = vrot.lane.b32.xlu0 %v1466, 126
        %v1503 = vpop.permute.xlu0 %1502
        %1504 = vrot.lane.b32.xlu0 %v1442, 126
        %v1505 = vpop.permute.xlu0 %1504
        %1506 = vrot.lane.b32.xlu0 %v1472, 126
        %v1507 = vpop.permute.xlu0 %1506
        %1508 = vrot.lane.b32.xlu0 %v1467, 126
        %v1509 = vpop.permute.xlu0 %1508
        %1510 = vrot.lane.b32.xlu0 %v1443, 126
        %v1511 = vpop.permute.xlu0 %1510
        %1512 = vrot.lane.b32.xlu0 %v1473, 126
        %v1513 = vpop.permute.xlu0 %1512
        %1514 = vrot.lane.b32.xlu0 %v1468, 126
        %v1515 = vpop.permute.xlu0 %1514
        %1516 = vrot.lane.b32.xlu0 %v1444, 126
        %v1517 = vpop.permute.xlu0 %1516
        %1518 = vrot.lane.b32.xlu0 %v1474, 126
        %v1519 = vpop.permute.xlu0 %1518
        %1520 = vrot.lane.b32.xlu0 %v1469, 126
        %v1521 = vpop.permute.xlu0 %1520
        %1522 = vrot.lane.b32.xlu0 %v1445, 126
        %v1523 = vpop.permute.xlu0 %1522
        %1524 = vrot.lane.b32.xlu0 %v1475, 126
        %v1525 = vpop.permute.xlu0 %1524
        %1526 = vrot.lane.b32.xlu0 %v1470, 126
        %v1527 = vpop.permute.xlu0 %1526
        %1528 = vrot.lane.b32.xlu0 %v1446, 126
        %v1529 = vpop.permute.xlu0 %1528
        %1530 = vrot.lane.b32.xlu0 %v1476, 126
        %v1531 = vpop.permute.xlu0 %1530
        %1532 = vrot.lane.b32.xlu0 %v1471, 126
        %v1533 = vpop.permute.xlu0 %1532
        %1534 = vrot.lane.b32.xlu0 %v1447, 126
        %v1535 = vpop.permute.xlu0 %1534
        %1536 = vrot.lane.b32.xlu0 %v1477, 126
        %v1537 = vpop.permute.xlu0 %1536
        %v1538 = vsel %vm731, %v1503, %v1505
        %v1539 = vsel %vm731, %v1505, %v1507
        %v1540 = vsel %vm731, %v1509, %v1511
        %v1541 = vsel %vm731, %v1511, %v1513
        %v1542 = vsel %vm731, %v1515, %v1517
        %v1543 = vsel %vm731, %v1517, %v1519
        %v1544 = vsel %vm731, %v1521, %v1523
        %v1545 = vsel %vm731, %v1523, %v1525
        %v1546 = vsel %vm731, %v1527, %v1529
        %v1547 = vsel %vm731, %v1529, %v1531
        %v1548 = vsel %vm731, %v1533, %v1535
        %v1549 = vsel %vm731, %v1535, %v1537
        %v1562 = vsel %vm713, %v1538, 0.0
        %v1563 = vsel %vm714, %v1539, 0.0
        %v1564 = vsel %vm713, %v1540, 0.0
        %v1565 = vsel %vm714, %v1541, 0.0
        %v1566 = vsel %vm713, %v1542, 0.0
        %v1567 = vsel %vm714, %v1543, 0.0
        %v1568 = vsel %vm713, %v1544, 0.0
        %v1569 = vsel %vm714, %v1545, 0.0
        %v1570 = vsel %vm713, %v1546, 0.0
        %v1571 = vsel %vm714, %v1547, 0.0
        %v1572 = vsel %vm713, %v1548, 0.0
        %v1573 = vsel %vm714, %v1549, 0.0
        %1574 = vrot.lane.b32.xlu0 %v1466, 112
        %v1575 = vpop.permute.xlu0 %1574
        %1576 = vrot.lane.b32.xlu0 %v1442, 112
        %v1577 = vpop.permute.xlu0 %1576
        %1578 = vrot.lane.b32.xlu0 %v1472, 112
        %v1579 = vpop.permute.xlu0 %1578
        %1580 = vrot.lane.b32.xlu0 %v1467, 112
        %v1581 = vpop.permute.xlu0 %1580
        %1582 = vrot.lane.b32.xlu0 %v1443, 112
        %v1583 = vpop.permute.xlu0 %1582
        %1584 = vrot.lane.b32.xlu0 %v1473, 112
        %v1585 = vpop.permute.xlu0 %1584
        %1586 = vrot.lane.b32.xlu0 %v1468, 112
        %v1587 = vpop.permute.xlu0 %1586
        %1588 = vrot.lane.b32.xlu0 %v1444, 112
        %v1589 = vpop.permute.xlu0 %1588
        %1590 = vrot.lane.b32.xlu0 %v1474, 112
        %v1591 = vpop.permute.xlu0 %1590
        %1592 = vrot.lane.b32.xlu0 %v1469, 112
        %v1593 = vpop.permute.xlu0 %1592
        %1594 = vrot.lane.b32.xlu0 %v1445, 112
        %v1595 = vpop.permute.xlu0 %1594
        %1596 = vrot.lane.b32.xlu0 %v1475, 112
        %v1597 = vpop.permute.xlu0 %1596
        %1598 = vrot.lane.b32.xlu0 %v1470, 112
        %v1599 = vpop.permute.xlu0 %1598
        %1600 = vrot.lane.b32.xlu0 %v1446, 112
        %v1601 = vpop.permute.xlu0 %1600
        %1602 = vrot.lane.b32.xlu0 %v1476, 112
        %v1603 = vpop.permute.xlu0 %1602
        %1604 = vrot.lane.b32.xlu0 %v1471, 112
        %v1605 = vpop.permute.xlu0 %1604
        %1606 = vrot.lane.b32.xlu0 %v1447, 112
        %v1607 = vpop.permute.xlu0 %1606
        %1608 = vrot.lane.b32.xlu0 %v1477, 112
        %v1609 = vpop.permute.xlu0 %1608
        %v1610 = vsel %vm756, %v1575, %v1577
        %v1611 = vsel %vm756, %v1577, %v1579
        %v1612 = vsel %vm756, %v1581, %v1583
        %v1613 = vsel %vm756, %v1583, %v1585
        %v1614 = vsel %vm756, %v1587, %v1589
        %v1615 = vsel %vm756, %v1589, %v1591
        %v1616 = vsel %vm756, %v1593, %v1595
        %v1617 = vsel %vm756, %v1595, %v1597
        %v1618 = vsel %vm756, %v1599, %v1601
        %v1619 = vsel %vm756, %v1601, %v1603
        %v1620 = vsel %vm756, %v1605, %v1607
        %v1621 = vsel %vm756, %v1607, %v1609
        %v1634 = vsel %vm697, %v1610, 0.0
        %v1635 = vsel %vm698, %v1611, 0.0
        %v1636 = vsel %vm697, %v1612, 0.0
        %v1637 = vsel %vm698, %v1613, 0.0
        %v1638 = vsel %vm697, %v1614, 0.0
        %v1639 = vsel %vm698, %v1615, 0.0
        %v1640 = vsel %vm697, %v1616, 0.0
        %v1641 = vsel %vm698, %v1617, 0.0
        %v1642 = vsel %vm697, %v1618, 0.0
        %v1643 = vsel %vm698, %v1619, 0.0
        %v1644 = vsel %vm697, %v1620, 0.0
        %v1645 = vsel %vm698, %v1621, 0.0
        %1646 = vrot.lane.b32.xlu0 %v1466, 110
        %v1647 = vpop.permute.xlu0 %1646
        %1648 = vrot.lane.b32.xlu0 %v1442, 110
        %v1649 = vpop.permute.xlu0 %1648
        %1650 = vrot.lane.b32.xlu0 %v1472, 110
        %v1651 = vpop.permute.xlu0 %1650
        %1652 = vrot.lane.b32.xlu0 %v1467, 110
        %v1653 = vpop.permute.xlu0 %1652
        %1654 = vrot.lane.b32.xlu0 %v1443, 110
        %v1655 = vpop.permute.xlu0 %1654
        %1656 = vrot.lane.b32.xlu0 %v1473, 110
        %v1657 = vpop.permute.xlu0 %1656
        %1658 = vrot.lane.b32.xlu0 %v1468, 110
        %v1659 = vpop.permute.xlu0 %1658
        %1660 = vrot.lane.b32.xlu0 %v1444, 110
        %v1661 = vpop.permute.xlu0 %1660
        %1662 = vrot.lane.b32.xlu0 %v1474, 110
        %v1663 = vpop.permute.xlu0 %1662
        %1664 = vrot.lane.b32.xlu0 %v1469, 110
        %v1665 = vpop.permute.xlu0 %1664
        %1666 = vrot.lane.b32.xlu0 %v1445, 110
        %v1667 = vpop.permute.xlu0 %1666
        %1668 = vrot.lane.b32.xlu0 %v1475, 110
        %v1669 = vpop.permute.xlu0 %1668
        %1670 = vrot.lane.b32.xlu0 %v1470, 110
        %v1671 = vpop.permute.xlu0 %1670
        %1672 = vrot.lane.b32.xlu0 %v1446, 110
        %v1673 = vpop.permute.xlu0 %1672
        %1674 = vrot.lane.b32.xlu0 %v1476, 110
        %v1675 = vpop.permute.xlu0 %1674
        %1676 = vrot.lane.b32.xlu0 %v1471, 110
        %v1677 = vpop.permute.xlu0 %1676
        %1678 = vrot.lane.b32.xlu0 %v1447, 110
        %v1679 = vpop.permute.xlu0 %1678
        %1680 = vrot.lane.b32.xlu0 %v1477, 110
        %v1681 = vpop.permute.xlu0 %1680
        %v1682 = vsel %vm781, %v1647, %v1649
        %v1683 = vsel %vm781, %v1649, %v1651
        %v1684 = vsel %vm781, %v1653, %v1655
        %v1685 = vsel %vm781, %v1655, %v1657
        %v1686 = vsel %vm781, %v1659, %v1661
        %v1687 = vsel %vm781, %v1661, %v1663
        %v1688 = vsel %vm781, %v1665, %v1667
        %v1689 = vsel %vm781, %v1667, %v1669
        %v1690 = vsel %vm781, %v1671, %v1673
        %v1691 = vsel %vm781, %v1673, %v1675
        %v1692 = vsel %vm781, %v1677, %v1679
        %v1693 = vsel %vm781, %v1679, %v1681
        %v1706 = vsel %vm713, %v1682, 0.0
        %v1707 = vsel %vm714, %v1683, 0.0
        %v1708 = vsel %vm713, %v1684, 0.0
        %v1709 = vsel %vm714, %v1685, 0.0
        %v1710 = vsel %vm713, %v1686, 0.0
        %v1711 = vsel %vm714, %v1687, 0.0
        %v1712 = vsel %vm713, %v1688, 0.0
        %v1713 = vsel %vm714, %v1689, 0.0
        %v1714 = vsel %vm713, %v1690, 0.0
        %v1715 = vsel %vm714, %v1691, 0.0
        %v1716 = vsel %vm713, %v1692, 0.0
        %v1717 = vsel %vm714, %v1693, 0.0
        %1718 = vrot.lane.b32.xlu0 %v1466, 96
        %v1719 = vpop.permute.xlu0 %1718
        %1720 = vrot.lane.b32.xlu0 %v1442, 96
        %v1721 = vpop.permute.xlu0 %1720
        %1722 = vrot.lane.b32.xlu0 %v1472, 96
        %v1723 = vpop.permute.xlu0 %1722
        %1724 = vrot.lane.b32.xlu0 %v1467, 96
        %v1725 = vpop.permute.xlu0 %1724
        %1726 = vrot.lane.b32.xlu0 %v1443, 96
        %v1727 = vpop.permute.xlu0 %1726
        %1728 = vrot.lane.b32.xlu0 %v1473, 96
        %v1729 = vpop.permute.xlu0 %1728
        %1730 = vrot.lane.b32.xlu0 %v1468, 96
        %v1731 = vpop.permute.xlu0 %1730
        %1732 = vrot.lane.b32.xlu0 %v1444, 96
        %v1733 = vpop.permute.xlu0 %1732
        %1734 = vrot.lane.b32.xlu0 %v1474, 96
        %v1735 = vpop.permute.xlu0 %1734
        %1736 = vrot.lane.b32.xlu0 %v1469, 96
        %v1737 = vpop.permute.xlu0 %1736
        %1738 = vrot.lane.b32.xlu0 %v1445, 96
        %v1739 = vpop.permute.xlu0 %1738
        %1740 = vrot.lane.b32.xlu0 %v1475, 96
        %v1741 = vpop.permute.xlu0 %1740
        %1742 = vrot.lane.b32.xlu0 %v1470, 96
        %v1743 = vpop.permute.xlu0 %1742
        %1744 = vrot.lane.b32.xlu0 %v1446, 96
        %v1745 = vpop.permute.xlu0 %1744
        %1746 = vrot.lane.b32.xlu0 %v1476, 96
        %v1747 = vpop.permute.xlu0 %1746
        %1748 = vrot.lane.b32.xlu0 %v1471, 96
        %v1749 = vpop.permute.xlu0 %1748
        %1750 = vrot.lane.b32.xlu0 %v1447, 96
        %v1751 = vpop.permute.xlu0 %1750
        %1752 = vrot.lane.b32.xlu0 %v1477, 96
        %v1753 = vpop.permute.xlu0 %1752
        %v1754 = vsel %vm806, %v1719, %v1721
        %v1755 = vsel %vm806, %v1721, %v1723
        %v1756 = vsel %vm806, %v1725, %v1727
        %v1757 = vsel %vm806, %v1727, %v1729
        %v1758 = vsel %vm806, %v1731, %v1733
        %v1759 = vsel %vm806, %v1733, %v1735
        %v1760 = vsel %vm806, %v1737, %v1739
        %v1761 = vsel %vm806, %v1739, %v1741
        %v1762 = vsel %vm806, %v1743, %v1745
        %v1763 = vsel %vm806, %v1745, %v1747
        %v1764 = vsel %vm806, %v1749, %v1751
        %v1765 = vsel %vm806, %v1751, %v1753
        %v1778 = vsel %vm697, %v1754, 0.0
        %v1779 = vsel %vm698, %v1755, 0.0
        %v1780 = vsel %vm697, %v1756, 0.0
        %v1781 = vsel %vm698, %v1757, 0.0
        %v1782 = vsel %vm697, %v1758, 0.0
        %v1783 = vsel %vm698, %v1759, 0.0
        %v1784 = vsel %vm697, %v1760, 0.0
        %v1785 = vsel %vm698, %v1761, 0.0
        %v1786 = vsel %vm697, %v1762, 0.0
        %v1787 = vsel %vm698, %v1763, 0.0
        %v1788 = vsel %vm697, %v1764, 0.0
        %v1789 = vsel %vm698, %v1765, 0.0
        %1790 = vrot.lane.b32.xlu0 %v1466, 94
        %v1791 = vpop.permute.xlu0 %1790
        %1792 = vrot.lane.b32.xlu0 %v1442, 94
        %v1793 = vpop.permute.xlu0 %1792
        %1794 = vrot.lane.b32.xlu0 %v1472, 94
        %v1795 = vpop.permute.xlu0 %1794
        %1796 = vrot.lane.b32.xlu0 %v1467, 94
        %v1797 = vpop.permute.xlu0 %1796
        %1798 = vrot.lane.b32.xlu0 %v1443, 94
        %v1799 = vpop.permute.xlu0 %1798
        %1800 = vrot.lane.b32.xlu0 %v1473, 94
        %v1801 = vpop.permute.xlu0 %1800
        %1802 = vrot.lane.b32.xlu0 %v1468, 94
        %v1803 = vpop.permute.xlu0 %1802
        %1804 = vrot.lane.b32.xlu0 %v1444, 94
        %v1805 = vpop.permute.xlu0 %1804
        %1806 = vrot.lane.b32.xlu0 %v1474, 94
        %v1807 = vpop.permute.xlu0 %1806
        %1808 = vrot.lane.b32.xlu0 %v1469, 94
        %v1809 = vpop.permute.xlu0 %1808
        %1810 = vrot.lane.b32.xlu0 %v1445, 94
        %v1811 = vpop.permute.xlu0 %1810
        %1812 = vrot.lane.b32.xlu0 %v1475, 94
        %v1813 = vpop.permute.xlu0 %1812
        %1814 = vrot.lane.b32.xlu0 %v1470, 94
        %v1815 = vpop.permute.xlu0 %1814
        %1816 = vrot.lane.b32.xlu0 %v1446, 94
        %v1817 = vpop.permute.xlu0 %1816
        %1818 = vrot.lane.b32.xlu0 %v1476, 94
        %v1819 = vpop.permute.xlu0 %1818
        %1820 = vrot.lane.b32.xlu0 %v1471, 94
        %v1821 = vpop.permute.xlu0 %1820
        %1822 = vrot.lane.b32.xlu0 %v1447, 94
        %v1823 = vpop.permute.xlu0 %1822
        %1824 = vrot.lane.b32.xlu0 %v1477, 94
        %v1825 = vpop.permute.xlu0 %1824
        %v1826 = vsel %vm831, %v1791, %v1793
        %v1827 = vsel %vm831, %v1793, %v1795
        %v1828 = vsel %vm831, %v1797, %v1799
        %v1829 = vsel %vm831, %v1799, %v1801
        %v1830 = vsel %vm831, %v1803, %v1805
        %v1831 = vsel %vm831, %v1805, %v1807
        %v1832 = vsel %vm831, %v1809, %v1811
        %v1833 = vsel %vm831, %v1811, %v1813
        %v1834 = vsel %vm831, %v1815, %v1817
        %v1835 = vsel %vm831, %v1817, %v1819
        %v1836 = vsel %vm831, %v1821, %v1823
        %v1837 = vsel %vm831, %v1823, %v1825
        %v1850 = vsel %vm713, %v1826, 0.0
        %v1851 = vsel %vm714, %v1827, 0.0
        %v1852 = vsel %vm713, %v1828, 0.0
        %v1853 = vsel %vm714, %v1829, 0.0
        %v1854 = vsel %vm713, %v1830, 0.0
        %v1855 = vsel %vm714, %v1831, 0.0
        %v1856 = vsel %vm713, %v1832, 0.0
        %v1857 = vsel %vm714, %v1833, 0.0
        %v1858 = vsel %vm713, %v1834, 0.0
        %v1859 = vsel %vm714, %v1835, 0.0
        %v1860 = vsel %vm713, %v1836, 0.0
        %v1861 = vsel %vm714, %v1837, 0.0
        %1862 = vrot.lane.b32.xlu0 %v1466, 127
        %v1863 = vpop.permute.xlu0 %1862
        %1864 = vrot.lane.b32.xlu0 %v1442, 127
        %v1865 = vpop.permute.xlu0 %1864
        %1866 = vrot.lane.b32.xlu0 %v1472, 127
        %v1867 = vpop.permute.xlu0 %1866
        %1868 = vrot.lane.b32.xlu0 %v1467, 127
        %v1869 = vpop.permute.xlu0 %1868
        %1870 = vrot.lane.b32.xlu0 %v1443, 127
        %v1871 = vpop.permute.xlu0 %1870
        %1872 = vrot.lane.b32.xlu0 %v1473, 127
        %v1873 = vpop.permute.xlu0 %1872
        %1874 = vrot.lane.b32.xlu0 %v1468, 127
        %v1875 = vpop.permute.xlu0 %1874
        %1876 = vrot.lane.b32.xlu0 %v1444, 127
        %v1877 = vpop.permute.xlu0 %1876
        %1878 = vrot.lane.b32.xlu0 %v1474, 127
        %v1879 = vpop.permute.xlu0 %1878
        %1880 = vrot.lane.b32.xlu0 %v1469, 127
        %v1881 = vpop.permute.xlu0 %1880
        %1882 = vrot.lane.b32.xlu0 %v1445, 127
        %v1883 = vpop.permute.xlu0 %1882
        %1884 = vrot.lane.b32.xlu0 %v1475, 127
        %v1885 = vpop.permute.xlu0 %1884
        %1886 = vrot.lane.b32.xlu0 %v1470, 127
        %v1887 = vpop.permute.xlu0 %1886
        %1888 = vrot.lane.b32.xlu0 %v1446, 127
        %v1889 = vpop.permute.xlu0 %1888
        %1890 = vrot.lane.b32.xlu0 %v1476, 127
        %v1891 = vpop.permute.xlu0 %1890
        %1892 = vrot.lane.b32.xlu0 %v1471, 127
        %v1893 = vpop.permute.xlu0 %1892
        %1894 = vrot.lane.b32.xlu0 %v1447, 127
        %v1895 = vpop.permute.xlu0 %1894
        %1896 = vrot.lane.b32.xlu0 %v1477, 127
        %v1897 = vpop.permute.xlu0 %1896
        %v1898 = vsel %vm856, %v1863, %v1865
        %v1899 = vsel %vm856, %v1865, %v1867
        %v1900 = vsel %vm856, %v1869, %v1871
        %v1901 = vsel %vm856, %v1871, %v1873
        %v1902 = vsel %vm856, %v1875, %v1877
        %v1903 = vsel %vm856, %v1877, %v1879
        %v1904 = vsel %vm856, %v1881, %v1883
        %v1905 = vsel %vm856, %v1883, %v1885
        %v1906 = vsel %vm856, %v1887, %v1889
        %v1907 = vsel %vm856, %v1889, %v1891
        %v1908 = vsel %vm856, %v1893, %v1895
        %v1909 = vsel %vm856, %v1895, %v1897
        %1922 = vrot.lane.b32.xlu0 %v1466, 111
        %v1923 = vpop.permute.xlu0 %1922
        %1924 = vrot.lane.b32.xlu0 %v1442, 111
        %v1925 = vpop.permute.xlu0 %1924
        %1926 = vrot.lane.b32.xlu0 %v1472, 111
        %v1927 = vpop.permute.xlu0 %1926
        %1928 = vrot.lane.b32.xlu0 %v1467, 111
        %v1929 = vpop.permute.xlu0 %1928
        %1930 = vrot.lane.b32.xlu0 %v1443, 111
        %v1931 = vpop.permute.xlu0 %1930
        %1932 = vrot.lane.b32.xlu0 %v1473, 111
        %v1933 = vpop.permute.xlu0 %1932
        %1934 = vrot.lane.b32.xlu0 %v1468, 111
        %v1935 = vpop.permute.xlu0 %1934
        %1936 = vrot.lane.b32.xlu0 %v1444, 111
        %v1937 = vpop.permute.xlu0 %1936
        %1938 = vrot.lane.b32.xlu0 %v1474, 111
        %v1939 = vpop.permute.xlu0 %1938
        %1940 = vrot.lane.b32.xlu0 %v1469, 111
        %v1941 = vpop.permute.xlu0 %1940
        %1942 = vrot.lane.b32.xlu0 %v1445, 111
        %v1943 = vpop.permute.xlu0 %1942
        %1944 = vrot.lane.b32.xlu0 %v1475, 111
        %v1945 = vpop.permute.xlu0 %1944
        %1946 = vrot.lane.b32.xlu0 %v1470, 111
        %v1947 = vpop.permute.xlu0 %1946
        %1948 = vrot.lane.b32.xlu0 %v1446, 111
        %v1949 = vpop.permute.xlu0 %1948
        %1950 = vrot.lane.b32.xlu0 %v1476, 111
        %v1951 = vpop.permute.xlu0 %1950
        %1952 = vrot.lane.b32.xlu0 %v1471, 111
        %v1953 = vpop.permute.xlu0 %1952
        %1954 = vrot.lane.b32.xlu0 %v1447, 111
        %v1955 = vpop.permute.xlu0 %1954
        %1956 = vrot.lane.b32.xlu0 %v1477, 111
        %v1957 = vpop.permute.xlu0 %1956
        %v1958 = vsel %vm877, %v1923, %v1925
        %v1959 = vsel %vm877, %v1925, %v1927
        %v1960 = vsel %vm877, %v1929, %v1931
        %v1961 = vsel %vm877, %v1931, %v1933
        %v1962 = vsel %vm877, %v1935, %v1937
        %v1963 = vsel %vm877, %v1937, %v1939
        %v1964 = vsel %vm877, %v1941, %v1943
        %v1965 = vsel %vm877, %v1943, %v1945
        %v1966 = vsel %vm877, %v1947, %v1949
        %v1967 = vsel %vm877, %v1949, %v1951
        %v1968 = vsel %vm877, %v1953, %v1955
        %v1969 = vsel %vm877, %v1955, %v1957
        %1982 = vrot.lane.b32.xlu0 %v1466, 95
        %v1983 = vpop.permute.xlu0 %1982
        %1984 = vrot.lane.b32.xlu0 %v1442, 95
        %v1985 = vpop.permute.xlu0 %1984
        %1986 = vrot.lane.b32.xlu0 %v1472, 95
        %v1987 = vpop.permute.xlu0 %1986
        %1988 = vrot.lane.b32.xlu0 %v1467, 95
        %v1989 = vpop.permute.xlu0 %1988
        %1990 = vrot.lane.b32.xlu0 %v1443, 95
        %v1991 = vpop.permute.xlu0 %1990
        %1992 = vrot.lane.b32.xlu0 %v1473, 95
        %v1993 = vpop.permute.xlu0 %1992
        %1994 = vrot.lane.b32.xlu0 %v1468, 95
        %v1995 = vpop.permute.xlu0 %1994
        %1996 = vrot.lane.b32.xlu0 %v1444, 95
        %v1997 = vpop.permute.xlu0 %1996
        %1998 = vrot.lane.b32.xlu0 %v1474, 95
        %v1999 = vpop.permute.xlu0 %1998
        %2000 = vrot.lane.b32.xlu0 %v1469, 95
        %v2001 = vpop.permute.xlu0 %2000
        %2002 = vrot.lane.b32.xlu0 %v1445, 95
        %v2003 = vpop.permute.xlu0 %2002
        %2004 = vrot.lane.b32.xlu0 %v1475, 95
        %v2005 = vpop.permute.xlu0 %2004
        %2006 = vrot.lane.b32.xlu0 %v1470, 95
        %v2007 = vpop.permute.xlu0 %2006
        %2008 = vrot.lane.b32.xlu0 %v1446, 95
        %v2009 = vpop.permute.xlu0 %2008
        %2010 = vrot.lane.b32.xlu0 %v1476, 95
        %v2011 = vpop.permute.xlu0 %2010
        %2012 = vrot.lane.b32.xlu0 %v1471, 95
        %v2013 = vpop.permute.xlu0 %2012
        %2014 = vrot.lane.b32.xlu0 %v1447, 95
        %v2015 = vpop.permute.xlu0 %2014
        %2016 = vrot.lane.b32.xlu0 %v1477, 95
        %v2017 = vpop.permute.xlu0 %2016
        %v2018 = vsel %vm898, %v1983, %v1985
        %v2019 = vsel %vm898, %v1985, %v1987
        %v2020 = vsel %vm898, %v1989, %v1991
        %v2021 = vsel %vm898, %v1991, %v1993
        %v2022 = vsel %vm898, %v1995, %v1997
        %v2023 = vsel %vm898, %v1997, %v1999
        %v2024 = vsel %vm898, %v2001, %v2003
        %v2025 = vsel %vm898, %v2003, %v2005
        %v2026 = vsel %vm898, %v2007, %v2009
        %v2027 = vsel %vm898, %v2009, %v2011
        %v2028 = vsel %vm898, %v2013, %v2015
        %v2029 = vsel %vm898, %v2015, %v2017
        %v2043 = vsel %vm1084, %v1393, 0
        %v2046 = vsel %vm1084, %v1397, 0
        %v2049 = vsel %vm1084, %v1401, 0
        %v2052 = vsel %vm1084, %v1405, 0
        %2054 = vmatprep.subr.mxu0 %v1569
        %2055 = vmatpush1.msra.mxu0 %v1568
        %2056 = vmatprep.subr.mxu0 %v1567
        %2057 = vmatpush1.msra.mxu0 %v1566
        %2058 = vmatprep.subr.mxu0 %v1565
        %2059 = vmatpush1.msra.mxu0 %v1564
        %2060 = vmatprep.subr.mxu0 %v1563
        %2061 = vmatpush1.msra.mxu0 %v1562
        %2062 = vmatprep.subr.mxu0 %v1909
        %2063 = vmatpush1.msra.mxu0 %v1908
        %2064 = vmatprep.subr.mxu0 %v1907
        %2065 = vmatpush1.msra.mxu0 %v1906
        %2066 = vmatprep.subr.mxu0 %v1905
        %2067 = vmatpush1.msra.mxu0 %v1904
        %2068 = vmatprep.subr.mxu0 %v1903
        %2069 = vmatpush1.msra.mxu0 %v1902
        %2070 = vmatprep.subr.mxu0 %v1901
        %2071 = vmatpush1.msra.mxu0 %v1900
        %2072 = vmatprep.subr.mxu0 %v1899
        %2073 = vmatpush1.msra.mxu0 %v1898
        %2074 = vmatprep.subr.mxu0 %v1489
        %2075 = vmatpush1.msra.mxu0 %v1488
        %2076 = vmatprep.subr.mxu0 %v1487
        %2077 = vmatpush1.msra.mxu0 %v1486
        %2078 = vmatprep.subr.mxu0 %v1485
        %2079 = vmatpush1.msra.mxu0 %v1484
        %2080 = vmatprep.subr.mxu0 %v1483
        %2081 = vmatpush1.msra.mxu0 %v1482
        %2082 = vmatprep.subr.mxu0 %v1481
        %2083 = vmatpush1.msra.mxu0 %v1480
        %2084 = vmatprep.subr.mxu0 %v1479
        %2085 = vmatpush1.msra.mxu0 %v1478
        %2086 = vmatprep.subr.mxu0 %v1709
        %2087 = vmatpush2.msra.mxu0 %v1708
        %2088 = vmatprep.subr.mxu0 %v1707
        %2089 = vmatpush2.msra.mxu0 %v1706
        %2090 = vmatprep.subr.mxu0 %v1969
        %2091 = vmatpush2.msra.mxu0 %v1968
        %2092 = vmatprep.subr.mxu0 %v1967
        %2093 = vmatpush2.msra.mxu0 %v1966
        %2094 = vmatprep.subr.mxu0 %v1965
        %2095 = vmatpush2.msra.mxu0 %v1964
        %2096 = vmatprep.subr.mxu0 %v1963
        %2097 = vmatpush2.msra.mxu0 %v1962
        %2098 = vmatprep.subr.mxu0 %v1961
        %2099 = vmatpush2.msra.mxu0 %v1960
        %2100 = vmatprep.subr.mxu0 %v1959
        %2101 = vmatpush2.msra.mxu0 %v1958
        %2102 = vmatprep.subr.mxu0 %v1645
        %2103 = vmatpush2.msra.mxu0 %v1644
        %2104 = vmatprep.subr.mxu0 %v1643
        %2105 = vmatpush2.msra.mxu0 %v1642
        %2106 = vmatprep.subr.mxu0 %v1641
        %2107 = vmatpush2.msra.mxu0 %v1640
        %2108 = vmatprep.subr.mxu0 %v1639
        %2109 = vmatpush2.msra.mxu0 %v1638
        %2110 = vmatprep.subr.mxu0 %v1637
        %2111 = vmatpush2.msra.mxu0 %v1636
        %2112 = vmatprep.subr.mxu0 %v1635
        %2113 = vmatpush2.msra.mxu0 %v1634
        %2114 = vmatprep.subr.mxu0 %v1573
        %2115 = vmatpush2.msra.mxu0 %v1572
        %2116 = vmatprep.subr.mxu0 %v1571
        %2117 = vmatpush2.msra.mxu0 %v1570
        %2118 = vmatprep.mubr.f32.mxu0 %v1391
        %2119 = vmatmul.mubr.f32.gmra.mxu0 %v1390
        %v2120 = vpop.f32.mrf.mxu0
        %v2121 = vadd.f32 0.0, %v2120
        %v2122 = vpop.f32.mrf.mxu0
        %v2123 = vadd.f32 0.0, %v2122
        %2124 = vmatprep.mubr.f32.mxu0 %v1395
        %2125 = vmatmul.mubr.f32.gmra.mxu0 %v1394
        %v2126 = vpop.f32.mrf.mxu0
        %v2127 = vadd.f32 0.0, %v2126
        %v2128 = vpop.f32.mrf.mxu0
        %v2129 = vadd.f32 0.0, %v2128
        %2130 = vmatprep.mubr.f32.mxu0 %v1399
        %2131 = vmatmul.mubr.f32.gmra.mxu0 %v1398
        %v2132 = vpop.f32.mrf.mxu0
        %v2133 = vadd.f32 0.0, %v2132
        %v2134 = vpop.f32.mrf.mxu0
        %v2135 = vadd.f32 0.0, %v2134
        %2136 = vmatprep.mubr.f32.mxu0 %v1403
        %2137 = vmatmul.mubr.f32.gmra.mxu0 %v1402
        %v2138 = vpop.f32.mrf.mxu0
        %v2139 = vadd.f32 0.0, %v2138
        %v2140 = vpop.f32.mrf.mxu0
        %v2141 = vadd.f32 0.0, %v2140
        %2142 = vdwg.mxu0
        %2143 = vmatprep.subr.mxu0 %v2029
        %2144 = vmatpush1.msra.mxu0 %v2028
        %2145 = vmatprep.subr.mxu0 %v2027
        %2146 = vmatpush1.msra.mxu0 %v2026
        %2147 = vmatprep.subr.mxu0 %v2025
        %2148 = vmatpush1.msra.mxu0 %v2024
        %2149 = vmatprep.subr.mxu0 %v2023
        %2150 = vmatpush1.msra.mxu0 %v2022
        %2151 = vmatprep.subr.mxu0 %v2021
        %2152 = vmatpush1.msra.mxu0 %v2020
        %2153 = vmatprep.subr.mxu0 %v2019
        %2154 = vmatpush1.msra.mxu0 %v2018
        %2155 = vmatprep.subr.mxu0 %v1789
        %2156 = vmatpush1.msra.mxu0 %v1788
        %2157 = vmatprep.subr.mxu0 %v1787
        %2158 = vmatpush1.msra.mxu0 %v1786
        %2159 = vmatprep.subr.mxu0 %v1785
        %2160 = vmatpush1.msra.mxu0 %v1784
        %2161 = vmatprep.subr.mxu0 %v1783
        %2162 = vmatpush1.msra.mxu0 %v1782
        %2163 = vmatprep.subr.mxu0 %v1781
        %2164 = vmatpush1.msra.mxu0 %v1780
        %2165 = vmatprep.subr.mxu0 %v1779
        %2166 = vmatpush1.msra.mxu0 %v1778
        %2167 = vmatprep.subr.mxu0 %v1717
        %2168 = vmatpush1.msra.mxu0 %v1716
        %2169 = vmatprep.subr.mxu0 %v1715
        %2170 = vmatpush1.msra.mxu0 %v1714
        %2171 = vmatprep.subr.mxu0 %v1713
        %2172 = vmatpush1.msra.mxu0 %v1712
        %2173 = vmatprep.subr.mxu0 %v1711
        %2174 = vmatpush1.msra.mxu0 %v1710
        %2175 = vmatprep.subr.mxu0 0.0
        %2176 = vmatpush2.msra.mxu0 0.0
        %2177 = vmatprep.subr.mxu0 0.0
        %2178 = vmatpush2.msra.mxu0 0.0
        %2179 = vmatprep.subr.mxu0 0.0
        %2180 = vmatpush2.msra.mxu0 0.0
        %2181 = vmatprep.subr.mxu0 0.0
        %2182 = vmatpush2.msra.mxu0 0.0
        %2183 = vmatprep.subr.mxu0 0.0
        %2184 = vmatpush2.msra.mxu0 0.0
        %2185 = vmatprep.subr.mxu0 0.0
        %2186 = vmatpush2.msra.mxu0 0.0
        %2187 = vmatprep.subr.mxu0 0.0
        %2188 = vmatpush2.msra.mxu0 0.0
        %2189 = vmatprep.subr.mxu0 0.0
        %2190 = vmatpush2.msra.mxu0 0.0
        %2191 = vmatprep.subr.mxu0 0.0
        %2192 = vmatpush2.msra.mxu0 0.0
        %2193 = vmatprep.subr.mxu0 0.0
        %2194 = vmatpush2.msra.mxu0 0.0
        %2195 = vmatprep.subr.mxu0 %v1861
        %2196 = vmatpush2.msra.mxu0 %v1860
        %2197 = vmatprep.subr.mxu0 %v1859
        %2198 = vmatpush2.msra.mxu0 %v1858
        %2199 = vmatprep.subr.mxu0 %v1857
        %2200 = vmatpush2.msra.mxu0 %v1856
        %2201 = vmatprep.subr.mxu0 %v1855
        %2202 = vmatpush2.msra.mxu0 %v1854
        %2203 = vmatprep.subr.mxu0 %v1853
        %2204 = vmatpush2.msra.mxu0 %v1852
        %2205 = vmatprep.subr.mxu0 %v1851
        %2206 = vmatpush2.msra.mxu0 %v1850
        %2207 = vmatprep.mubr.f32.mxu0 %v2043
        %2208 = vmatmul.mubr.f32.gmra.mxu0 %v1392
        %v2209 = vpop.f32.mrf.mxu0
        %v2210 = vadd.f32 %v2121, %v2209
        %v2211 = vpop.f32.mrf.mxu0
        %v2212 = vadd.f32 %v2123, %v2211
        %2213 = vmatprep.mubr.f32.mxu0 %v2046
        %2214 = vmatmul.mubr.f32.gmra.mxu0 %v1396
        %v2215 = vpop.f32.mrf.mxu0
        %v2216 = vadd.f32 %v2127, %v2215
        %v2217 = vpop.f32.mrf.mxu0
        %v2218 = vadd.f32 %v2129, %v2217
        %2219 = vmatprep.mubr.f32.mxu0 %v2049
        %2220 = vmatmul.mubr.f32.gmra.mxu0 %v1400
        %v2221 = vpop.f32.mrf.mxu0
        %v2222 = vadd.f32 %v2133, %v2221
        %v2223 = vpop.f32.mrf.mxu0
        %v2224 = vadd.f32 %v2135, %v2223
        %2225 = vmatprep.mubr.f32.mxu0 %v2052
        %2226 = vmatmul.mubr.f32.gmra.mxu0 %v1404
        %v2227 = vpop.f32.mrf.mxu0
        %v2228 = vadd.f32 %v2139, %v2227
        %v2229 = vpop.f32.mrf.mxu0
        %v2230 = vadd.f32 %v2141, %v2229
        %2231 = vdwg.mxu0
        %v2232 = vadd.f32 %v2210, %v474
        %v2233 = vadd.f32 %v2212, %v475
        %v2234 = vadd.f32 %v2216, %v476
        %v2235 = vadd.f32 %v2218, %v477
        %2236 = vst [vmem:[%s473] sm:$0xff] %v2232
        %2237 = vst [vmem:[%s473 + $0x8] sm:$0xff] %v2233
        %2238 = vst [vmem:[%s473 + $0x10] sm:$0xff] %v2234
        %2239 = vst [vmem:[%s473 + $0x18] sm:$0xff] %v2235
        %2240 = vst [vmem:[%s473 + $0x20] sm:$0xff] %v2222
        %2241 = vst [vmem:[%s473 + $0x28] sm:$0xff] %v2224
        %2242 = vst [vmem:[%s473 + $0x30] sm:$0xff] %v2228
        %2243 = vst [vmem:[%s473 + $0x38] sm:$0xff] %v2230
        %s2244 = sand.u32 %s281, 1
        %s2245 = scalar_lea.sflag [#allocation4], %s2244
        %s2246 = sand.u32 %s281, 1
        %s2247 = smul.addr %s2246, 64
        %s2248 = scalar_lea.vmem [#allocation10], %s2247
        // Predicated region
        $region81: #{tpu_custom_call.1} parent=63 // pred_check
          %p2249 = pneg %p291
        $region82: #{tpu_custom_call.1} parent=63 // pred_check_branch
          %2251 = sbr.rel (%p2249) target = $region84
        $region83: #{tpu_custom_call.1} parent=63 // pred_region
          %s2253 = ssub.s32 1024, 1024
          %2254 = vsyncadd %s2245, %s2253
          %s2255 = smul.addr %s32, 8
          %s2256 = smul.addr %s2255, 128
          %s2257 = scalar_lea.hbm %s11, %s2256
          %s2258 = sshll.u32 %s2248, 4
          %s2259 = int_to_ptr.vmem [resolvable:$true] %s2258
          %2264 = dma.vmem_to_hbm [thread:$0]  %s2259, 1024, %s2257, %s2245, 256, 256, 16
        $region84: #{tpu_custom_call.1} parent=63 // pred_fallthru
          _
      $region64: #{tpu_custom_call.1} parent=5 // pred_fallthru
        _
      %p2265 = scmp.le.s32.totalorder 2, %s27
      // Predicated region
      $region85: #{tpu_custom_call.1} parent=5 // pred_check
        %p2266 = pneg %p2265
      $region86: #{tpu_custom_call.1} parent=5 // pred_check_branch
        %2268 = sbr.rel (%p2266) target = $region88
      $region87: #{tpu_custom_call.1} parent=5 // pred_region
        %s2269 = ssub.s32 %s27, 2
        // Predicated region
        $region89: #{tpu_custom_call.1} parent=87 // pred_check
          %p2270 = pneg %p297
        $region90: #{tpu_custom_call.1} parent=87 // pred_check_branch
          %2272 = sbr.rel (%p2270) target = $region92
        $region91: #{tpu_custom_call.1} parent=87 // pred_region
          %s2273 = sand.u32 %s282, 1
          %s2274 = scalar_lea.sflag [#allocation4], %s2273
          %s2275 = sand.u32 %s282, 1
          %s2276 = smul.addr %s2275, 64
          %s2277 = scalar_lea.vmem [#allocation10], %s2276
          %2278 = dma.done %s2274, 1024
        $region92: #{tpu_custom_call.1} parent=87 // pred_fallthru
          _
      $region88: #{tpu_custom_call.1} parent=5 // pred_fallthru
        _
    $region6: #{tpu_custom_call.1} parent=1 // loop_footer
      %s31 = sadd.s32 1, %s27
    $region7: #{tpu_custom_call.1} parent=1 // loop_footer_branch
      %26 = sbr.rel target = $region3
    $region8: #{tpu_custom_call.1} parent=1 // loop_exit
      _
    %2279 = vsyncpa [#allocation3], 1
    %s2280 = scalar_lea.sflag [#allocation3], 1
    %2281 = vsyncpa %s2280, 1
    %2282 = vsyncpa [#allocation6], 1
    %s2283 = scalar_lea.sflag [#allocation6], 1
    %2284 = vsyncpa %s2283, 1
    %2285 = vsyncpa [#allocation9], 1
    %2286 = vsyncpa [#allocation4], 1
    %s2287 = scalar_lea.sflag [#allocation4], 1
    %2288 = vsyncpa %s2287, 1

</llo_original>
